<compile_context>
chip_gen: v5e
topology: v5e:2x2
jax: 0.10.0
libtpu: 0.0.40
codegen_flags: <defaults>
</compile_context>

<pallas_src>
import functools

import jax
import jax.numpy as jnp
from jax.experimental import pallas as pl
from jax.experimental.pallas import tpu as pltpu

NEG_SLOPE = 0.01          # nn.LeakyReLU() default
BN_EPS = 1e-5             # nn.BatchNorm1d default
LANES = 128               # lane width; every feature dim is zero-padded to this

# (in_features, out_features) for the 7 Linear layers
LAYER_DIMS = [(2, 16), (16, 32), (32, 64), (64, 128), (128, 64), (64, 32), (32, 10)]
HAS_BN = [True, True, True, True, True, True, False]   # BN after all but the last
N_LAYERS = len(LAYER_DIMS)
N_OUT = LAYER_DIMS[-1][1]


def _leaky_relu(h):
    return jnp.where(h >= 0, h, NEG_SLOPE * h)


def mlp_kernel(x_ref, w_ref, b_ref, out_ref):
    """Fused eval-mode MLP.

    x_ref:   (TB, 2)          input tile, batch on the sublane axis
    w_ref:   (7, 128, 128)    zero-padded, BN-folded weights, (in, out) layout
    b_ref:   (7, 128)         zero-padded, BN-folded biases
    out_ref: (TB, 128)        lane-dense output; logits live in lanes [:10]
    """
    x = x_ref[...].astype(jnp.float32)                      # (TB, 2)

    # Layer 0 (K=2): two VPU broadcast-FMAs instead of a degenerate MXU matmul.
    w0 = w_ref[0]                                           # (128, 128)
    h = x[:, 0:1] * w0[0:1, :] + x[:, 1:2] * w0[1:2, :] + b_ref[0:1, :]
    h = _leaky_relu(h)

    # Layers 1..6: lane-dense 128x128 matmuls (padded lanes stay exactly zero
    # because padded weight rows/cols and bias lanes are zero).
    for li in range(1, N_LAYERS):
        h = jnp.dot(h, w_ref[li], preferred_element_type=jnp.float32)
        h = h + b_ref[li:li + 1, :]
        if li < N_LAYERS - 1:
            h = _leaky_relu(h)
        # last layer: raw logits (BN of layer 5 already folded into W/b)

    out_ref[...] = h.astype(out_ref.dtype)


def init_params(key):
    """PyTorch-like parameters (unfolded): Linear W/b + BatchNorm gamma/beta/stats."""
    params = []
    for li, (fin, fout) in enumerate(LAYER_DIMS):
        key, kw, kb, kg, kbt, km, kv = jax.random.split(key, 7)
        bound = 1.0 / jnp.sqrt(fin)
        layer = {
            # weight stored already transposed: (in_features, out_features)
            "w": jax.random.uniform(kw, (fin, fout), jnp.float32, -bound, bound),
            "b": jax.random.uniform(kb, (fout,), jnp.float32, -bound, bound),
        }
        if HAS_BN[li]:
            layer["gamma"] = jax.random.uniform(kg, (fout,), jnp.float32, 0.5, 1.5)
            layer["beta"] = jax.random.uniform(kbt, (fout,), jnp.float32, -0.5, 0.5)
            layer["running_mean"] = jax.random.uniform(km, (fout,), jnp.float32, -0.5, 0.5)
            layer["running_var"] = jax.random.uniform(kv, (fout,), jnp.float32, 0.5, 2.0)
        params.append(layer)
    return params


def fold_and_pack_params(params):
    """Fold each eval-mode BatchNorm into the NEXT Linear layer and pack into slabs.

    y = s*a + t feeding a Linear (a @ W + b) is equivalent to
        a @ (diag(s) @ W) + (t @ W + b),
    so the kernel only ever does matmul + bias (+ LeakyReLU).
    """
    w_slab = jnp.zeros((N_LAYERS, LANES, LANES), jnp.float32)
    b_slab = jnp.zeros((N_LAYERS, LANES), jnp.float32)
    prev_scale = None
    prev_shift = None
    for li, (fin, fout) in enumerate(LAYER_DIMS):
        w = params[li]["w"]
        b = params[li]["b"]
        if prev_scale is not None:
            b = prev_shift @ w + b
            w = prev_scale[:, None] * w
        w_slab = w_slab.at[li, :fin, :fout].set(w)
        b_slab = b_slab.at[li, :fout].set(b)
        if HAS_BN[li]:
            p = params[li]
            scale = p["gamma"] / jnp.sqrt(p["running_var"] + BN_EPS)
            shift = p["beta"] - p["running_mean"] * scale
            prev_scale, prev_shift = scale, shift
        else:
            prev_scale, prev_shift = None, None
    return w_slab, b_slab


@functools.partial(jax.jit, static_argnames=("block_b",))
def mlp_forward(x, w_slab, b_slab, *, block_b=256):
    B = x.shape[0]
    n_blocks = pl.cdiv(B, block_b)
    b_pad = n_blocks * block_b
    if b_pad != B:
        x = jnp.pad(x, ((0, b_pad - B), (0, 0)))

    out = pl.pallas_call(
        mlp_kernel,
        out_shape=jax.ShapeDtypeStruct((b_pad, LANES), jnp.float32),
        grid_spec=pltpu.PrefetchScalarGridSpec(
            num_scalar_prefetch=0,
            grid=(n_blocks,),
            in_specs=[
                pl.BlockSpec((block_b, x.shape[1]), lambda i: (i, 0)),
                pl.BlockSpec((N_LAYERS, LANES, LANES), lambda i: (0, 0, 0)),
                pl.BlockSpec((N_LAYERS, LANES), lambda i: (0, 0)),
            ],
            out_specs=pl.BlockSpec((block_b, LANES), lambda i: (i, 0)),
        ),
        compiler_params=pltpu.CompilerParams(
            dimension_semantics=("parallel",),
        ),
    )(x, w_slab, b_slab)

    return out[:B, :N_OUT]


def mlp_reference(x, params):
    """Pure-JAX reference of the original eval-mode PyTorch forward (unfolded)."""
    h = x
    for li in range(N_LAYERS):
        p = params[li]
        h = h @ p["w"] + p["b"]
        if li < N_LAYERS - 1:
            h = jnp.where(h >= 0, h, NEG_SLOPE * h)
        if HAS_BN[li]:
            inv = p["gamma"] / jnp.sqrt(p["running_var"] + BN_EPS)
            h = (h - p["running_mean"]) * inv + p["beta"]
        # Dropout(0.25) is identity at eval time
    return h


if __name__ == "__main__":
    key = jax.random.PRNGKey(0)
    kp, kx = jax.random.split(key)

    params = init_params(kp)
    w_slab, b_slab = fold_and_pack_params(params)

    B = 512                                          # 2 grid programs at block_b=256
    x = jax.random.normal(kx, (B, 2), jnp.float32)   # MLP input: 2 features

    out = mlp_forward(x, w_slab, b_slab, block_b=256)
    out = jax.block_until_ready(out)

    ref = mlp_reference(x, params)
    assert out.shape == (B, N_OUT), out.shape
    max_err = float(jnp.max(jnp.abs(out - ref)))
    assert jnp.allclose(out, ref, atol=1e-3, rtol=1e-3), max_err

    print("KERNEL_OK")
</pallas_src>

<mosaic_0001>
module attributes {stable_mosaic.version = 11 : i64} {
  func.func @mlp_kernel(%arg0: i32, %arg1: memref<256x2xf32, #tpu.memory_space<vmem>>, %arg2: memref<7x128x128xf32, #tpu.memory_space<vmem>>, %arg3: memref<7x128xf32, #tpu.memory_space<vmem>>, %arg4: memref<256x128xf32, #tpu.memory_space<vmem>>) attributes {dimension_semantics = [#tpu.dimension_semantics<parallel>], iteration_bounds = array<i64: 2>, scalar_prefetch = 0 : i64, scratch_operands = 0 : i64, tpu.core_type = #tpu.core_type<tc>, window_params = [{transform_indices = @transform_0, window_bounds = array<i64: 256, 2>}, {pipeline_mode = #tpu.pipeline_mode<synchronous>, transform_indices = @transform_1, window_bounds = array<i64: 7, 128, 128>}, {pipeline_mode = #tpu.pipeline_mode<synchronous>, transform_indices = @transform_2, window_bounds = array<i64: 7, 128>}, {transform_indices = @transform_3, window_bounds = array<i64: 256, 128>}]} {
    %c0 = arith.constant 0 : index
    %c0_0 = arith.constant 0 : index
    %0 = vector.load %arg1[%c0, %c0_0] : memref<256x2xf32, #tpu.memory_space<vmem>>, vector<256x2xf32>
    %c0_1 = arith.constant 0 : index
    %c0_2 = arith.constant 0 : index
    %c0_3 = arith.constant 0 : index
    %1 = vector.load %arg2[%c0_1, %c0_2, %c0_3] : memref<7x128x128xf32, #tpu.memory_space<vmem>>, vector<1x128x128xf32>
    %2 = vector.shape_cast %1 : vector<1x128x128xf32> to vector<128x128xf32>
    %3 = vector.extract_strided_slice %0 {offsets = [0, 0], sizes = [256, 1], strides = [1, 1]} : vector<256x2xf32> to vector<256x1xf32>
    %4 = vector.extract_strided_slice %2 {offsets = [0, 0], sizes = [1, 128], strides = [1, 1]} : vector<128x128xf32> to vector<1x128xf32>
    %5 = vector.broadcast %3 : vector<256x1xf32> to vector<256x128xf32>
    %6 = vector.broadcast %4 : vector<1x128xf32> to vector<256x128xf32>
    %7 = arith.mulf %5, %6 : vector<256x128xf32>
    %8 = vector.extract_strided_slice %0 {offsets = [0, 1], sizes = [256, 1], strides = [1, 1]} : vector<256x2xf32> to vector<256x1xf32>
    %9 = vector.extract_strided_slice %2 {offsets = [1, 0], sizes = [1, 128], strides = [1, 1]} : vector<128x128xf32> to vector<1x128xf32>
    %10 = vector.broadcast %8 : vector<256x1xf32> to vector<256x128xf32>
    %11 = vector.broadcast %9 : vector<1x128xf32> to vector<256x128xf32>
    %12 = arith.mulf %10, %11 : vector<256x128xf32>
    %13 = arith.addf %7, %12 : vector<256x128xf32>
    %c0_4 = arith.constant 0 : index
    %c0_5 = arith.constant 0 : index
    %14 = vector.load %arg3[%c0_4, %c0_5] : memref<7x128xf32, #tpu.memory_space<vmem>>, vector<1x128xf32>
    %15 = vector.broadcast %14 : vector<1x128xf32> to vector<256x128xf32>
    %16 = arith.addf %13, %15 : vector<256x128xf32>
    %cst = arith.constant 0.000000e+00 : f32
    %17 = vector.broadcast %cst : f32 to vector<256x128xf32>
    %18 = arith.cmpf oge, %16, %17 : vector<256x128xf32>
    %cst_6 = arith.constant 0.00999999977 : f32
    %19 = vector.broadcast %cst_6 : f32 to vector<256x128xf32>
    %20 = arith.mulf %19, %16 : vector<256x128xf32>
    %21 = arith.select %18, %16, %20 : vector<256x128xi1>, vector<256x128xf32>
    %c1 = arith.constant 1 : index
    %c0_7 = arith.constant 0 : index
    %c0_8 = arith.constant 0 : index
    %22 = vector.load %arg2[%c1, %c0_7, %c0_8] : memref<7x128x128xf32, #tpu.memory_space<vmem>>, vector<1x128x128xf32>
    %23 = vector.shape_cast %22 : vector<1x128x128xf32> to vector<128x128xf32>
    %cst_9 = arith.constant dense<0.000000e+00> : vector<256x128xf32>
    %24 = tpu.matmul %21, %23, %cst_9 {dimension_numbers = #tpu.dot_dimension_numbers<[1], [0], [0], [1], [0, 0, 1, 1], [], []>} : vector<256x128xf32>, vector<128x128xf32>, vector<256x128xf32> -> vector<256x128xf32>
    %c1_10 = arith.constant 1 : index
    %c0_11 = arith.constant 0 : index
    %25 = vector.load %arg3[%c1_10, %c0_11] : memref<7x128xf32, #tpu.memory_space<vmem>>, vector<1x128xf32>
    %26 = vector.broadcast %25 : vector<1x128xf32> to vector<256x128xf32>
    %27 = arith.addf %24, %26 : vector<256x128xf32>
    %cst_12 = arith.constant 0.000000e+00 : f32
    %28 = vector.broadcast %cst_12 : f32 to vector<256x128xf32>
    %29 = arith.cmpf oge, %27, %28 : vector<256x128xf32>
    %cst_13 = arith.constant 0.00999999977 : f32
    %30 = vector.broadcast %cst_13 : f32 to vector<256x128xf32>
    %31 = arith.mulf %30, %27 : vector<256x128xf32>
    %32 = arith.select %29, %27, %31 : vector<256x128xi1>, vector<256x128xf32>
    %c2 = arith.constant 2 : index
    %c0_14 = arith.constant 0 : index
    %c0_15 = arith.constant 0 : index
    %33 = vector.load %arg2[%c2, %c0_14, %c0_15] : memref<7x128x128xf32, #tpu.memory_space<vmem>>, vector<1x128x128xf32>
    %34 = vector.shape_cast %33 : vector<1x128x128xf32> to vector<128x128xf32>
    %cst_16 = arith.constant dense<0.000000e+00> : vector<256x128xf32>
    %35 = tpu.matmul %32, %34, %cst_16 {dimension_numbers = #tpu.dot_dimension_numbers<[1], [0], [0], [1], [0, 0, 1, 1], [], []>} : vector<256x128xf32>, vector<128x128xf32>, vector<256x128xf32> -> vector<256x128xf32>
    %c2_17 = arith.constant 2 : index
    %c0_18 = arith.constant 0 : index
    %36 = vector.load %arg3[%c2_17, %c0_18] : memref<7x128xf32, #tpu.memory_space<vmem>>, vector<1x128xf32>
    %37 = vector.broadcast %36 : vector<1x128xf32> to vector<256x128xf32>
    %38 = arith.addf %35, %37 : vector<256x128xf32>
    %cst_19 = arith.constant 0.000000e+00 : f32
    %39 = vector.broadcast %cst_19 : f32 to vector<256x128xf32>
    %40 = arith.cmpf oge, %38, %39 : vector<256x128xf32>
    %cst_20 = arith.constant 0.00999999977 : f32
    %41 = vector.broadcast %cst_20 : f32 to vector<256x128xf32>
    %42 = arith.mulf %41, %38 : vector<256x128xf32>
    %43 = arith.select %40, %38, %42 : vector<256x128xi1>, vector<256x128xf32>
    %c3 = arith.constant 3 : index
    %c0_21 = arith.constant 0 : index
    %c0_22 = arith.constant 0 : index
    %44 = vector.load %arg2[%c3, %c0_21, %c0_22] : memref<7x128x128xf32, #tpu.memory_space<vmem>>, vector<1x128x128xf32>
    %45 = vector.shape_cast %44 : vector<1x128x128xf32> to vector<128x128xf32>
    %cst_23 = arith.constant dense<0.000000e+00> : vector<256x128xf32>
    %46 = tpu.matmul %43, %45, %cst_23 {dimension_numbers = #tpu.dot_dimension_numbers<[1], [0], [0], [1], [0, 0, 1, 1], [], []>} : vector<256x128xf32>, vector<128x128xf32>, vector<256x128xf32> -> vector<256x128xf32>
    %c3_24 = arith.constant 3 : index
    %c0_25 = arith.constant 0 : index
    %47 = vector.load %arg3[%c3_24, %c0_25] : memref<7x128xf32, #tpu.memory_space<vmem>>, vector<1x128xf32>
    %48 = vector.broadcast %47 : vector<1x128xf32> to vector<256x128xf32>
    %49 = arith.addf %46, %48 : vector<256x128xf32>
    %cst_26 = arith.constant 0.000000e+00 : f32
    %50 = vector.broadcast %cst_26 : f32 to vector<256x128xf32>
    %51 = arith.cmpf oge, %49, %50 : vector<256x128xf32>
    %cst_27 = arith.constant 0.00999999977 : f32
    %52 = vector.broadcast %cst_27 : f32 to vector<256x128xf32>
    %53 = arith.mulf %52, %49 : vector<256x128xf32>
    %54 = arith.select %51, %49, %53 : vector<256x128xi1>, vector<256x128xf32>
    %c4 = arith.constant 4 : index
    %c0_28 = arith.constant 0 : index
    %c0_29 = arith.constant 0 : index
    %55 = vector.load %arg2[%c4, %c0_28, %c0_29] : memref<7x128x128xf32, #tpu.memory_space<vmem>>, vector<1x128x128xf32>
    %56 = vector.shape_cast %55 : vector<1x128x128xf32> to vector<128x128xf32>
    %cst_30 = arith.constant dense<0.000000e+00> : vector<256x128xf32>
    %57 = tpu.matmul %54, %56, %cst_30 {dimension_numbers = #tpu.dot_dimension_numbers<[1], [0], [0], [1], [0, 0, 1, 1], [], []>} : vector<256x128xf32>, vector<128x128xf32>, vector<256x128xf32> -> vector<256x128xf32>
    %c4_31 = arith.constant 4 : index
    %c0_32 = arith.constant 0 : index
    %58 = vector.load %arg3[%c4_31, %c0_32] : memref<7x128xf32, #tpu.memory_space<vmem>>, vector<1x128xf32>
    %59 = vector.broadcast %58 : vector<1x128xf32> to vector<256x128xf32>
    %60 = arith.addf %57, %59 : vector<256x128xf32>
    %cst_33 = arith.constant 0.000000e+00 : f32
    %61 = vector.broadcast %cst_33 : f32 to vector<256x128xf32>
    %62 = arith.cmpf oge, %60, %61 : vector<256x128xf32>
    %cst_34 = arith.constant 0.00999999977 : f32
    %63 = vector.broadcast %cst_34 : f32 to vector<256x128xf32>
    %64 = arith.mulf %63, %60 : vector<256x128xf32>
    %65 = arith.select %62, %60, %64 : vector<256x128xi1>, vector<256x128xf32>
    %c5 = arith.constant 5 : index
    %c0_35 = arith.constant 0 : index
    %c0_36 = arith.constant 0 : index
    %66 = vector.load %arg2[%c5, %c0_35, %c0_36] : memref<7x128x128xf32, #tpu.memory_space<vmem>>, vector<1x128x128xf32>
    %67 = vector.shape_cast %66 : vector<1x128x128xf32> to vector<128x128xf32>
    %cst_37 = arith.constant dense<0.000000e+00> : vector<256x128xf32>
    %68 = tpu.matmul %65, %67, %cst_37 {dimension_numbers = #tpu.dot_dimension_numbers<[1], [0], [0], [1], [0, 0, 1, 1], [], []>} : vector<256x128xf32>, vector<128x128xf32>, vector<256x128xf32> -> vector<256x128xf32>
    %c5_38 = arith.constant 5 : index
    %c0_39 = arith.constant 0 : index
    %69 = vector.load %arg3[%c5_38, %c0_39] : memref<7x128xf32, #tpu.memory_space<vmem>>, vector<1x128xf32>
    %70 = vector.broadcast %69 : vector<1x128xf32> to vector<256x128xf32>
    %71 = arith.addf %68, %70 : vector<256x128xf32>
    %cst_40 = arith.constant 0.000000e+00 : f32
    %72 = vector.broadcast %cst_40 : f32 to vector<256x128xf32>
    %73 = arith.cmpf oge, %71, %72 : vector<256x128xf32>
    %cst_41 = arith.constant 0.00999999977 : f32
    %74 = vector.broadcast %cst_41 : f32 to vector<256x128xf32>
    %75 = arith.mulf %74, %71 : vector<256x128xf32>
    %76 = arith.select %73, %71, %75 : vector<256x128xi1>, vector<256x128xf32>
    %c6 = arith.constant 6 : index
    %c0_42 = arith.constant 0 : index
    %c0_43 = arith.constant 0 : index
    %77 = vector.load %arg2[%c6, %c0_42, %c0_43] : memref<7x128x128xf32, #tpu.memory_space<vmem>>, vector<1x128x128xf32>
    %78 = vector.shape_cast %77 : vector<1x128x128xf32> to vector<128x128xf32>
    %cst_44 = arith.constant dense<0.000000e+00> : vector<256x128xf32>
    %79 = tpu.matmul %76, %78, %cst_44 {dimension_numbers = #tpu.dot_dimension_numbers<[1], [0], [0], [1], [0, 0, 1, 1], [], []>} : vector<256x128xf32>, vector<128x128xf32>, vector<256x128xf32> -> vector<256x128xf32>
    %c6_45 = arith.constant 6 : index
    %c0_46 = arith.constant 0 : index
    %80 = vector.load %arg3[%c6_45, %c0_46] : memref<7x128xf32, #tpu.memory_space<vmem>>, vector<1x128xf32>
    %81 = vector.broadcast %80 : vector<1x128xf32> to vector<256x128xf32>
    %82 = arith.addf %79, %81 : vector<256x128xf32>
    %c0_47 = arith.constant 0 : index
    %c0_48 = arith.constant 0 : index
    %83 = vector.load %arg4[%c0_47, %c0_48] : memref<256x128xf32, #tpu.memory_space<vmem>>, vector<256x128xf32>
    tpu.vector_store %arg4[%c0_47, %c0_48], %82 {strides = array<i32>} : memref<256x128xf32, #tpu.memory_space<vmem>>, vector<256x128xf32>,
    return
  }
  func.func @transform_0(%arg0: i32) -> (i32, i32) {
    %c0_i32 = arith.constant 0 : i32
    %c0_i32_0 = arith.constant 0 : i32
    return %arg0, %c0_i32 : i32, i32
  }
  func.func @transform_1(%arg0: i32) -> (i32, i32, i32) {
    %c0_i32 = arith.constant 0 : i32
    %c0_i32_0 = arith.constant 0 : i32
    %c0_i32_1 = arith.constant 0 : i32
    %c0_i32_2 = arith.constant 0 : i32
    return %c0_i32, %c0_i32_0, %c0_i32_1 : i32, i32, i32
  }
  func.func @transform_2(%arg0: i32) -> (i32, i32) {
    %c0_i32 = arith.constant 0 : i32
    %c0_i32_0 = arith.constant 0 : i32
    %c0_i32_1 = arith.constant 0 : i32
    return %c0_i32, %c0_i32_0 : i32, i32
  }
  func.func @transform_3(%arg0: i32) -> (i32, i32) {
    %c0_i32 = arith.constant 0 : i32
    %c0_i32_0 = arith.constant 0 : i32
    return %arg0, %c0_i32 : i32, i32
  }
}

</mosaic_0001>

<llo_original>
// kernel: mlp_forward.1
$region0: #{mlp_forward.1}
  #allocation0 [shape = 'u32[]', space=smem, size = 0x4, offset = 0x4, fixed_abs, tag = 'smem constant byte address 0x4 - core index']
  #allocation1 [shape = 'u32[72,128]{1,0:T(1,128)}', space=vmem, size = 0x9000, scoped, tag = 'internal scratch']
  %s0 = inlined_call_operand.vmem [shape: f32[512,2], index: 0, kind: input, shape index: {}]
  %s1 = inlined_call_operand.hbm [shape: f32[7,128,128], index: 1, kind: input, shape index: {}]
  %s2 = inlined_call_operand.vmem [shape: f32[7,128], index: 2, kind: input, shape index: {}]
  %s3 = inlined_call_operand.vmem [shape: f32[512,128], index: 3, kind: output, shape index: {}]
  %s4 = sld [smem:[#allocation0]]
  $region49: #{mlp_forward.1} parent=0
    _
  %s6 = ssub.s32 1, %s4
  %s7 = scalar_select 0, %s6, %s4
  $region1: #{mlp_forward.1} parent=0
    #allocation2 [shape = 'u8[458752]{0}', space=vmem, size = 0x70000, scoped, tag = 'input window, operand 1, single buffered']
    #allocation3 [shape = 's32[2]{0}', space=sflag, size = 0x8, scoped, tag = 'scoped memory for mlp_forward.1']
    %8 = vsyncpa [#allocation3], 0
    loop: start=0, step=1, limit=4
    $region2: #{mlp_forward.1} parent=1 // loop_pre_header
      _
    $region3: #{mlp_forward.1} parent=1 // loop_header
      %s10 = sphi 0, %s14
      %p11 = scmp.ge.s32.totalorder %s10, 4
      %s20 = sphi 0, %s22
      %s23 = sphi 0, %s20
      %s24 = sphi 0, %s23
      %s40 = sphi 0, %s24
      %s44 = sphi 0, %s44
      %s46 = sphi 0, %s44
      %s47 = sphi 0, %s46
      %s61 = sphi 0, %s47
      %s65 = sphi 0, %s65
      %s67 = sphi 0, %s65
      %s68 = sphi 0, %s67
      %s82 = sphi 0, %s68
      %s88 = sphi 0, %s90
      %s91 = sphi 0, %s88
      %s92 = sphi 0, %s91
      %s108 = sphi 0, %s92
    $region4: #{mlp_forward.1} parent=1 // loop_header_branch
      %13 = sbr.rel (%p11) target = $region8
    $region5: #{mlp_forward.1} parent=1 // loop_body
      %s15 = ssub.s32 %s10, 1
      %s16 = ssub.s32 %s10, 2
      %s17 = sadd.s32 %s10, 1
      %s18 = ssub.s32 %s10, %s17
      %p19 = scmp.eq.s32.totalorder %s18, 0
      %s21 = sadd.s32 %s20, 1
      %s22 = scalar_select %p19, %s20, %s21
      %p25 = pneg %p19
      %p26 = scmp.eq.s32.totalorder %s10, 1
      %p27 = por %p25, %p26
      %p28 = scmp.ne.s32.totalorder %s20, %s23
      %p29 = scmp.eq.s32.totalorder %s10, 0
      %p30 = por %p28, %p29
      %p31 = scmp.ne.s32.totalorder %s20, %s23
      %p32 = scmp.eq.s32.totalorder %s15, 1
      %p33 = por %p31, %p32
      %p34 = scmp.ne.s32.totalorder %s23, %s24
      %p35 = scmp.eq.s32.totalorder %s15, 0
      %p36 = por %p34, %p35
      %p37 = scmp.ne.s32.totalorder %s23, %s24
      %p38 = scmp.eq.s32.totalorder %s16, 1
      %p39 = por %p37, %p38
      %p41 = scmp.ne.s32.totalorder %s24, %s40
      %p42 = scmp.eq.s32.totalorder %s16, 0
      %p43 = por %p41, %p42
      %s45 = sadd.s32 %s44, 1
      %p48 = scmp.eq.s32.totalorder %s10, 1
      %p49 = scmp.ne.s32.totalorder %s44, %s46
      %p50 = scmp.eq.s32.totalorder %s10, 0
      %p51 = por %p49, %p50
      %p52 = scmp.ne.s32.totalorder %s44, %s46
      %p53 = scmp.eq.s32.totalorder %s15, 1
      %p54 = por %p52, %p53
      %p55 = scmp.ne.s32.totalorder %s46, %s47
      %p56 = scmp.eq.s32.totalorder %s15, 0
      %p57 = por %p55, %p56
      %p58 = scmp.ne.s32.totalorder %s46, %s47
      %p59 = scmp.eq.s32.totalorder %s16, 1
      %p60 = por %p58, %p59
      %p62 = scmp.ne.s32.totalorder %s47, %s61
      %p63 = scmp.eq.s32.totalorder %s16, 0
      %p64 = por %p62, %p63
      %s66 = sadd.s32 %s65, 1
      %p69 = scmp.eq.s32.totalorder %s10, 1
      %p70 = scmp.ne.s32.totalorder %s65, %s67
      %p71 = scmp.eq.s32.totalorder %s10, 0
      %p72 = por %p70, %p71
      %p73 = scmp.ne.s32.totalorder %s65, %s67
      %p74 = scmp.eq.s32.totalorder %s15, 1
      %p75 = por %p73, %p74
      %p76 = scmp.ne.s32.totalorder %s67, %s68
      %p77 = scmp.eq.s32.totalorder %s15, 0
      %p78 = por %p76, %p77
      %p79 = scmp.ne.s32.totalorder %s67, %s68
      %p80 = scmp.eq.s32.totalorder %s16, 1
      %p81 = por %p79, %p80
      %p83 = scmp.ne.s32.totalorder %s68, %s82
      %p84 = scmp.eq.s32.totalorder %s16, 0
      %p85 = por %p83, %p84
      %s86 = ssub.s32 %s10, %s17
      %p87 = scmp.eq.s32.totalorder %s86, 0
      %s89 = sadd.s32 %s88, 1
      %s90 = scalar_select %p87, %s88, %s89
      %p93 = pneg %p87
      %p94 = scmp.eq.s32.totalorder %s10, 1
      %p95 = por %p93, %p94
      %p96 = scmp.ne.s32.totalorder %s88, %s91
      %p97 = scmp.eq.s32.totalorder %s10, 0
      %p98 = por %p96, %p97
      %p99 = scmp.ne.s32.totalorder %s88, %s91
      %p100 = scmp.eq.s32.totalorder %s15, 1
      %p101 = por %p99, %p100
      %p102 = scmp.ne.s32.totalorder %s91, %s92
      %p103 = scmp.eq.s32.totalorder %s15, 0
      %p104 = por %p102, %p103
      %p105 = scmp.ne.s32.totalorder %s91, %s92
      %p106 = scmp.eq.s32.totalorder %s16, 1
      %p107 = por %p105, %p106
      %p109 = scmp.ne.s32.totalorder %s92, %s108
      %p110 = scmp.eq.s32.totalorder %s16, 0
      %p111 = por %p109, %p110
      %p112 = scmp.le.s32.totalorder 1, %s10
      %p113 = scmp.lt.s32.totalorder %s10, 3
      %p114 = pnand %p112, %p113
      %p115 = pneg %p114
      // Predicated region
      $region9: #{mlp_forward.1} parent=5 // pred_check
        _
      $region10: #{mlp_forward.1} parent=5 // pred_check_branch
        %117 = sbr.rel (%p114) target = $region12
      $region11: #{mlp_forward.1} parent=5 // pred_region
        %s118 = ssub.s32 %s10, 1
        // Predicated region
        $region13: #{mlp_forward.1} parent=11 // pred_check
          %p119 = pneg %p57
        $region14: #{mlp_forward.1} parent=11 // pred_check_branch
          %121 = sbr.rel (%p119) target = $region16
        $region15: #{mlp_forward.1} parent=11 // pred_region
          %123 = vsyncadd [#allocation3], 0
          %s124 = sshll.u32 %s1, 4
          %s125 = int_to_ptr.hbm [resolvable:$true] %s124
          %s126 = sshll.u32 [#allocation2], 4
          %s127 = int_to_ptr.vmem [resolvable:$true] %s126
          %132 = dma.hbm_to_vmem [thread:$0]  %s125, 14336, %s127, [#allocation3], 128, 128, 8
        $region16: #{mlp_forward.1} parent=11 // pred_fallthru
          _
        // Predicated region
        $region17: #{mlp_forward.1} parent=11 // pred_check
          %p133 = pneg %p78
        $region18: #{mlp_forward.1} parent=11 // pred_check_branch
          %135 = sbr.rel (%p133) target = $region20
        $region19: #{mlp_forward.1} parent=11 // pred_region
          _
        $region20: #{mlp_forward.1} parent=11 // pred_fallthru
          _
      $region12: #{mlp_forward.1} parent=5 // pred_fallthru
        _
      %p136 = scmp.lt.s32.totalorder %s10, 2
      // Predicated region
      $region21: #{mlp_forward.1} parent=5 // pred_check
        %p137 = pneg %p136
      $region22: #{mlp_forward.1} parent=5 // pred_check_branch
        %139 = sbr.rel (%p137) target = $region24
      $region23: #{mlp_forward.1} parent=5 // pred_region
        // Predicated region
        $region25: #{mlp_forward.1} parent=23 // pred_check
          %p140 = pneg %p30
        $region26: #{mlp_forward.1} parent=23 // pred_check_branch
          %142 = sbr.rel (%p140) target = $region28
        $region27: #{mlp_forward.1} parent=23 // pred_region
          %s143 = smul.u32 32, %s10
          %p144 = scmp.lt.s32.totalorder %s143, 63
          %s145 = scalar_select %p144, %s143, 63
          %s146 = smul.addr %s145, 8
          %s147 = scalar_lea.vmem %s0, %s146
          %s148 = smul.u32 32, %s10
        $region28: #{mlp_forward.1} parent=23 // pred_fallthru
          _
      $region24: #{mlp_forward.1} parent=5 // pred_fallthru
        _
      %p149 = scmp.le.s32.totalorder 1, %s10
      %p150 = scmp.lt.s32.totalorder %s10, 3
      %p151 = pnand %p149, %p150
      %p152 = pneg %p151
      // Predicated region
      $region29: #{mlp_forward.1} parent=5 // pred_check
        _
      $region30: #{mlp_forward.1} parent=5 // pred_check_branch
        %154 = sbr.rel (%p151) target = $region32
      $region31: #{mlp_forward.1} parent=5 // pred_region
        %s155 = ssub.s32 %s10, 1
        // Predicated region
        $region33: #{mlp_forward.1} parent=31 // pred_check
          %p156 = pneg %p57
        $region34: #{mlp_forward.1} parent=31 // pred_check_branch
          %158 = sbr.rel (%p156) target = $region36
        $region35: #{mlp_forward.1} parent=31 // pred_region
          %160 = dma.done [#allocation3], 14336
        $region36: #{mlp_forward.1} parent=31 // pred_fallthru
          _
        %s161 = smul.u32 32, %s15
        %p162 = scmp.lt.s32.totalorder %s161, 63
        %s163 = scalar_select %p162, %s161, 63
        %s164 = smul.addr %s163, 8
        %s165 = scalar_lea.vmem %s0, %s164
        %p166 = pneg %p36
        %p167 = pneg %p33
        %p168 = pneg %p57
        %p169 = pneg %p54
        %p170 = pneg %p78
        %p171 = pneg %p75
        %p172 = pneg %p104
        %p173 = pneg %p101
        %s174 = smul.u32 32, %s15
        %p175 = scmp.lt.s32.totalorder %s174, 63
        %s176 = scalar_select %p175, %s174, 63
        %s177 = smul.addr %s176, 8
        %s178 = scalar_lea.vmem %s3, %s177
        %s179 = smul.u32 32, %s15
        %p180 = scmp.lt.s32.totalorder %s179, 63
        %s181 = scalar_select %p180, %s179, 63
        %s182 = smul.addr %s181, 8
        %s183 = scalar_lea.vmem %s0, %s182
        %s184 = smul.u32 32, %s15
        %s185 = smul.u32 32, %s15
        %p186 = scmp.lt.s32.totalorder %s185, 63
        %s187 = scalar_select %p186, %s185, 63
        %s188 = smul.addr %s187, 8
        %s189 = scalar_lea.vmem %s3, %s188
        %s190 = smul.u32 32, %s15
        %v191 = vld [vmem:[%s183] sm:$0xff]
        %v192 = vld [vmem:[%s183 + $0x8] sm:$0xff]
        %v193 = vld [vmem:[%s183 + $0x10] sm:$0xff]
        %v194 = vld [vmem:[%s183 + $0x18] sm:$0xff]
        %v195 = vld [vmem:[%s183 + $0x20] sm:$0xff]
        %v196 = vld [vmem:[%s183 + $0x28] sm:$0xff]
        %v197 = vld [vmem:[%s183 + $0x30] sm:$0xff]
        %v198 = vld [vmem:[%s183 + $0x38] sm:$0xff]
        %v199 = vld [vmem:[%s183 + $0x40] sm:$0xff]
        %v200 = vld [vmem:[%s183 + $0x48] sm:$0xff]
        %v201 = vld [vmem:[%s183 + $0x50] sm:$0xff]
        %v202 = vld [vmem:[%s183 + $0x58] sm:$0xff]
        %v203 = vld [vmem:[%s183 + $0x60] sm:$0xff]
        %v204 = vld [vmem:[%s183 + $0x68] sm:$0xff]
        %v205 = vld [vmem:[%s183 + $0x70] sm:$0xff]
        %v206 = vld [vmem:[%s183 + $0x78] sm:$0xff]
        %v207 = vld [vmem:[%s183 + $0x80] sm:$0xff]
        %v208 = vld [vmem:[%s183 + $0x88] sm:$0xff]
        %v209 = vld [vmem:[%s183 + $0x90] sm:$0xff]
        %v210 = vld [vmem:[%s183 + $0x98] sm:$0xff]
        %v211 = vld [vmem:[%s183 + $0xa0] sm:$0xff]
        %v212 = vld [vmem:[%s183 + $0xa8] sm:$0xff]
        %v213 = vld [vmem:[%s183 + $0xb0] sm:$0xff]
        %v214 = vld [vmem:[%s183 + $0xb8] sm:$0xff]
        %v215 = vld [vmem:[%s183 + $0xc0] sm:$0xff]
        %v216 = vld [vmem:[%s183 + $0xc8] sm:$0xff]
        %v217 = vld [vmem:[%s183 + $0xd0] sm:$0xff]
        %v218 = vld [vmem:[%s183 + $0xd8] sm:$0xff]
        %v219 = vld [vmem:[%s183 + $0xe0] sm:$0xff]
        %v220 = vld [vmem:[%s183 + $0xe8] sm:$0xff]
        %v221 = vld [vmem:[%s183 + $0xf0] sm:$0xff]
        %v222 = vld [vmem:[%s183 + $0xf8] sm:$0xff]
        %v223 = vld [vmem:[#allocation2] sm:$0xff]
        %225 = vset.pattern.permute.xlu0 0
        %226 = vperm.xlu0 %225, %v191
        %v227 = vpop.permute.xlu0 %226
        %230 = vset.pattern.permute.xlu0 0
        %231 = vperm.xlu0 %230, %v192
        %v232 = vpop.permute.xlu0 %231
        %235 = vset.pattern.permute.xlu0 0
        %236 = vperm.xlu0 %235, %v193
        %v237 = vpop.permute.xlu0 %236
        %240 = vset.pattern.permute.xlu0 0
        %241 = vperm.xlu0 %240, %v194
        %v242 = vpop.permute.xlu0 %241
        %245 = vset.pattern.permute.xlu0 0
        %246 = vperm.xlu0 %245, %v195
        %v247 = vpop.permute.xlu0 %246
        %250 = vset.pattern.permute.xlu0 0
        %251 = vperm.xlu0 %250, %v196
        %v252 = vpop.permute.xlu0 %251
        %255 = vset.pattern.permute.xlu0 0
        %256 = vperm.xlu0 %255, %v197
        %v257 = vpop.permute.xlu0 %256
        %260 = vset.pattern.permute.xlu0 0
        %261 = vperm.xlu0 %260, %v198
        %v262 = vpop.permute.xlu0 %261
        %265 = vset.pattern.permute.xlu0 0
        %266 = vperm.xlu0 %265, %v199
        %v267 = vpop.permute.xlu0 %266
        %270 = vset.pattern.permute.xlu0 0
        %271 = vperm.xlu0 %270, %v200
        %v272 = vpop.permute.xlu0 %271
        %275 = vset.pattern.permute.xlu0 0
        %276 = vperm.xlu0 %275, %v201
        %v277 = vpop.permute.xlu0 %276
        %280 = vset.pattern.permute.xlu0 0
        %281 = vperm.xlu0 %280, %v202
        %v282 = vpop.permute.xlu0 %281
        %285 = vset.pattern.permute.xlu0 0
        %286 = vperm.xlu0 %285, %v203
        %v287 = vpop.permute.xlu0 %286
        %290 = vset.pattern.permute.xlu0 0
        %291 = vperm.xlu0 %290, %v204
        %v292 = vpop.permute.xlu0 %291
        %295 = vset.pattern.permute.xlu0 0
        %296 = vperm.xlu0 %295, %v205
        %v297 = vpop.permute.xlu0 %296
        %300 = vset.pattern.permute.xlu0 0
        %301 = vperm.xlu0 %300, %v206
        %v302 = vpop.permute.xlu0 %301
        %305 = vset.pattern.permute.xlu0 0
        %306 = vperm.xlu0 %305, %v207
        %v307 = vpop.permute.xlu0 %306
        %310 = vset.pattern.permute.xlu0 0
        %311 = vperm.xlu0 %310, %v208
        %v312 = vpop.permute.xlu0 %311
        %315 = vset.pattern.permute.xlu0 0
        %316 = vperm.xlu0 %315, %v209
        %v317 = vpop.permute.xlu0 %316
        %320 = vset.pattern.permute.xlu0 0
        %321 = vperm.xlu0 %320, %v210
        %v322 = vpop.permute.xlu0 %321
        %325 = vset.pattern.permute.xlu0 0
        %326 = vperm.xlu0 %325, %v211
        %v327 = vpop.permute.xlu0 %326
        %330 = vset.pattern.permute.xlu0 0
        %331 = vperm.xlu0 %330, %v212
        %v332 = vpop.permute.xlu0 %331
        %335 = vset.pattern.permute.xlu0 0
        %336 = vperm.xlu0 %335, %v213
        %v337 = vpop.permute.xlu0 %336
        %340 = vset.pattern.permute.xlu0 0
        %341 = vperm.xlu0 %340, %v214
        %v342 = vpop.permute.xlu0 %341
        %345 = vset.pattern.permute.xlu0 0
        %346 = vperm.xlu0 %345, %v215
        %v347 = vpop.permute.xlu0 %346
        %350 = vset.pattern.permute.xlu0 0
        %351 = vperm.xlu0 %350, %v216
        %v352 = vpop.permute.xlu0 %351
        %355 = vset.pattern.permute.xlu0 0
        %356 = vperm.xlu0 %355, %v217
        %v357 = vpop.permute.xlu0 %356
        %360 = vset.pattern.permute.xlu0 0
        %361 = vperm.xlu0 %360, %v218
        %v362 = vpop.permute.xlu0 %361
        %365 = vset.pattern.permute.xlu0 0
        %366 = vperm.xlu0 %365, %v219
        %v367 = vpop.permute.xlu0 %366
        %370 = vset.pattern.permute.xlu0 0
        %371 = vperm.xlu0 %370, %v220
        %v372 = vpop.permute.xlu0 %371
        %375 = vset.pattern.permute.xlu0 0
        %376 = vperm.xlu0 %375, %v221
        %v377 = vpop.permute.xlu0 %376
        %380 = vset.pattern.permute.xlu0 0
        %381 = vperm.xlu0 %380, %v222
        %v382 = vpop.permute.xlu0 %381
        %v384 = vperm.slane %v223, 0
        %v385 = vmul.f32 %v227, %v384
        %v386 = vmul.f32 %v232, %v384
        %v387 = vmul.f32 %v237, %v384
        %v388 = vmul.f32 %v242, %v384
        %v389 = vmul.f32 %v247, %v384
        %v390 = vmul.f32 %v252, %v384
        %v391 = vmul.f32 %v257, %v384
        %v392 = vmul.f32 %v262, %v384
        %v393 = vmul.f32 %v267, %v384
        %v394 = vmul.f32 %v272, %v384
        %v395 = vmul.f32 %v277, %v384
        %v396 = vmul.f32 %v282, %v384
        %v397 = vmul.f32 %v287, %v384
        %v398 = vmul.f32 %v292, %v384
        %v399 = vmul.f32 %v297, %v384
        %v400 = vmul.f32 %v302, %v384
        %v401 = vmul.f32 %v307, %v384
        %v402 = vmul.f32 %v312, %v384
        %v403 = vmul.f32 %v317, %v384
        %v404 = vmul.f32 %v322, %v384
        %v405 = vmul.f32 %v327, %v384
        %v406 = vmul.f32 %v332, %v384
        %v407 = vmul.f32 %v337, %v384
        %v408 = vmul.f32 %v342, %v384
        %v409 = vmul.f32 %v347, %v384
        %v410 = vmul.f32 %v352, %v384
        %v411 = vmul.f32 %v357, %v384
        %v412 = vmul.f32 %v362, %v384
        %v413 = vmul.f32 %v367, %v384
        %v414 = vmul.f32 %v372, %v384
        %v415 = vmul.f32 %v377, %v384
        %v416 = vmul.f32 %v382, %v384
        %417 = vset.pattern.permute.xlu0 1
        %418 = vperm.xlu0 %417, %v191
        %v419 = vpop.permute.xlu0 %418
        %421 = vset.pattern.permute.xlu0 1
        %422 = vperm.xlu0 %421, %v192
        %v423 = vpop.permute.xlu0 %422
        %425 = vset.pattern.permute.xlu0 1
        %426 = vperm.xlu0 %425, %v193
        %v427 = vpop.permute.xlu0 %426
        %429 = vset.pattern.permute.xlu0 1
        %430 = vperm.xlu0 %429, %v194
        %v431 = vpop.permute.xlu0 %430
        %433 = vset.pattern.permute.xlu0 1
        %434 = vperm.xlu0 %433, %v195
        %v435 = vpop.permute.xlu0 %434
        %437 = vset.pattern.permute.xlu0 1
        %438 = vperm.xlu0 %437, %v196
        %v439 = vpop.permute.xlu0 %438
        %441 = vset.pattern.permute.xlu0 1
        %442 = vperm.xlu0 %441, %v197
        %v443 = vpop.permute.xlu0 %442
        %445 = vset.pattern.permute.xlu0 1
        %446 = vperm.xlu0 %445, %v198
        %v447 = vpop.permute.xlu0 %446
        %449 = vset.pattern.permute.xlu0 1
        %450 = vperm.xlu0 %449, %v199
        %v451 = vpop.permute.xlu0 %450
        %453 = vset.pattern.permute.xlu0 1
        %454 = vperm.xlu0 %453, %v200
        %v455 = vpop.permute.xlu0 %454
        %457 = vset.pattern.permute.xlu0 1
        %458 = vperm.xlu0 %457, %v201
        %v459 = vpop.permute.xlu0 %458
        %461 = vset.pattern.permute.xlu0 1
        %462 = vperm.xlu0 %461, %v202
        %v463 = vpop.permute.xlu0 %462
        %465 = vset.pattern.permute.xlu0 1
        %466 = vperm.xlu0 %465, %v203
        %v467 = vpop.permute.xlu0 %466
        %469 = vset.pattern.permute.xlu0 1
        %470 = vperm.xlu0 %469, %v204
        %v471 = vpop.permute.xlu0 %470
        %473 = vset.pattern.permute.xlu0 1
        %474 = vperm.xlu0 %473, %v205
        %v475 = vpop.permute.xlu0 %474
        %477 = vset.pattern.permute.xlu0 1
        %478 = vperm.xlu0 %477, %v206
        %v479 = vpop.permute.xlu0 %478
        %481 = vset.pattern.permute.xlu0 1
        %482 = vperm.xlu0 %481, %v207
        %v483 = vpop.permute.xlu0 %482
        %485 = vset.pattern.permute.xlu0 1
        %486 = vperm.xlu0 %485, %v208
        %v487 = vpop.permute.xlu0 %486
        %489 = vset.pattern.permute.xlu0 1
        %490 = vperm.xlu0 %489, %v209
        %v491 = vpop.permute.xlu0 %490
        %493 = vset.pattern.permute.xlu0 1
        %494 = vperm.xlu0 %493, %v210
        %v495 = vpop.permute.xlu0 %494
        %497 = vset.pattern.permute.xlu0 1
        %498 = vperm.xlu0 %497, %v211
        %v499 = vpop.permute.xlu0 %498
        %501 = vset.pattern.permute.xlu0 1
        %502 = vperm.xlu0 %501, %v212
        %v503 = vpop.permute.xlu0 %502
        %505 = vset.pattern.permute.xlu0 1
        %506 = vperm.xlu0 %505, %v213
        %v507 = vpop.permute.xlu0 %506
        %509 = vset.pattern.permute.xlu0 1
        %510 = vperm.xlu0 %509, %v214
        %v511 = vpop.permute.xlu0 %510
        %513 = vset.pattern.permute.xlu0 1
        %514 = vperm.xlu0 %513, %v215
        %v515 = vpop.permute.xlu0 %514
        %517 = vset.pattern.permute.xlu0 1
        %518 = vperm.xlu0 %517, %v216
        %v519 = vpop.permute.xlu0 %518
        %521 = vset.pattern.permute.xlu0 1
        %522 = vperm.xlu0 %521, %v217
        %v523 = vpop.permute.xlu0 %522
        %525 = vset.pattern.permute.xlu0 1
        %526 = vperm.xlu0 %525, %v218
        %v527 = vpop.permute.xlu0 %526
        %529 = vset.pattern.permute.xlu0 1
        %530 = vperm.xlu0 %529, %v219
        %v531 = vpop.permute.xlu0 %530
        %533 = vset.pattern.permute.xlu0 1
        %534 = vperm.xlu0 %533, %v220
        %v535 = vpop.permute.xlu0 %534
        %537 = vset.pattern.permute.xlu0 1
        %538 = vperm.xlu0 %537, %v221
        %v539 = vpop.permute.xlu0 %538
        %541 = vset.pattern.permute.xlu0 1
        %542 = vperm.xlu0 %541, %v222
        %v543 = vpop.permute.xlu0 %542
        %v545 = vperm.slane %v223, 1
        %v546 = vmul.f32 %v419, %v545
        %v547 = vmul.f32 %v423, %v545
        %v548 = vmul.f32 %v427, %v545
        %v549 = vmul.f32 %v431, %v545
        %v550 = vmul.f32 %v435, %v545
        %v551 = vmul.f32 %v439, %v545
        %v552 = vmul.f32 %v443, %v545
        %v553 = vmul.f32 %v447, %v545
        %v554 = vmul.f32 %v451, %v545
        %v555 = vmul.f32 %v455, %v545
        %v556 = vmul.f32 %v459, %v545
        %v557 = vmul.f32 %v463, %v545
        %v558 = vmul.f32 %v467, %v545
        %v559 = vmul.f32 %v471, %v545
        %v560 = vmul.f32 %v475, %v545
        %v561 = vmul.f32 %v479, %v545
        %v562 = vmul.f32 %v483, %v545
        %v563 = vmul.f32 %v487, %v545
        %v564 = vmul.f32 %v491, %v545
        %v565 = vmul.f32 %v495, %v545
        %v566 = vmul.f32 %v499, %v545
        %v567 = vmul.f32 %v503, %v545
        %v568 = vmul.f32 %v507, %v545
        %v569 = vmul.f32 %v511, %v545
        %v570 = vmul.f32 %v515, %v545
        %v571 = vmul.f32 %v519, %v545
        %v572 = vmul.f32 %v523, %v545
        %v573 = vmul.f32 %v527, %v545
        %v574 = vmul.f32 %v531, %v545
        %v575 = vmul.f32 %v535, %v545
        %v576 = vmul.f32 %v539, %v545
        %v577 = vmul.f32 %v543, %v545
        %v578 = vadd.f32 %v385, %v546
        %v579 = vadd.f32 %v386, %v547
        %v580 = vadd.f32 %v387, %v548
        %v581 = vadd.f32 %v388, %v549
        %v582 = vadd.f32 %v389, %v550
        %v583 = vadd.f32 %v390, %v551
        %v584 = vadd.f32 %v391, %v552
        %v585 = vadd.f32 %v392, %v553
        %v586 = vadd.f32 %v393, %v554
        %v587 = vadd.f32 %v394, %v555
        %v588 = vadd.f32 %v395, %v556
        %v589 = vadd.f32 %v396, %v557
        %v590 = vadd.f32 %v397, %v558
        %v591 = vadd.f32 %v398, %v559
        %v592 = vadd.f32 %v399, %v560
        %v593 = vadd.f32 %v400, %v561
        %v594 = vadd.f32 %v401, %v562
        %v595 = vadd.f32 %v402, %v563
        %v596 = vadd.f32 %v403, %v564
        %v597 = vadd.f32 %v404, %v565
        %v598 = vadd.f32 %v405, %v566
        %v599 = vadd.f32 %v406, %v567
        %v600 = vadd.f32 %v407, %v568
        %v601 = vadd.f32 %v408, %v569
        %v602 = vadd.f32 %v409, %v570
        %v603 = vadd.f32 %v410, %v571
        %v604 = vadd.f32 %v411, %v572
        %v605 = vadd.f32 %v412, %v573
        %v606 = vadd.f32 %v413, %v574
        %v607 = vadd.f32 %v414, %v575
        %v608 = vadd.f32 %v415, %v576
        %v609 = vadd.f32 %v416, %v577
        %v610 = vld [vmem:[%s2] sm:$0x1]
        %v611 = vperm.slane %v610, 0
        %v612 = vadd.f32 %v578, %v611
        %v613 = vadd.f32 %v579, %v611
        %v614 = vadd.f32 %v580, %v611
        %v615 = vadd.f32 %v581, %v611
        %v616 = vadd.f32 %v582, %v611
        %v617 = vadd.f32 %v583, %v611
        %v618 = vadd.f32 %v584, %v611
        %v619 = vadd.f32 %v585, %v611
        %v620 = vadd.f32 %v586, %v611
        %v621 = vadd.f32 %v587, %v611
        %v622 = vadd.f32 %v588, %v611
        %v623 = vadd.f32 %v589, %v611
        %v624 = vadd.f32 %v590, %v611
        %v625 = vadd.f32 %v591, %v611
        %v626 = vadd.f32 %v592, %v611
        %v627 = vadd.f32 %v593, %v611
        %v628 = vadd.f32 %v594, %v611
        %v629 = vadd.f32 %v595, %v611
        %v630 = vadd.f32 %v596, %v611
        %v631 = vadd.f32 %v597, %v611
        %v632 = vadd.f32 %v598, %v611
        %v633 = vadd.f32 %v599, %v611
        %v634 = vadd.f32 %v600, %v611
        %v635 = vadd.f32 %v601, %v611
        %v636 = vadd.f32 %v602, %v611
        %v637 = vadd.f32 %v603, %v611
        %v638 = vadd.f32 %v604, %v611
        %v639 = vadd.f32 %v605, %v611
        %v640 = vadd.f32 %v606, %v611
        %v641 = vadd.f32 %v607, %v611
        %v642 = vadd.f32 %v608, %v611
        %v643 = vadd.f32 %v609, %v611
        %vm644 = vcmp.ge.f32.partialorder %v612, 0.0
        %vm645 = vcmp.ge.f32.partialorder %v613, 0.0
        %vm646 = vcmp.ge.f32.partialorder %v614, 0.0
        %vm647 = vcmp.ge.f32.partialorder %v615, 0.0
        %vm648 = vcmp.ge.f32.partialorder %v616, 0.0
        %vm649 = vcmp.ge.f32.partialorder %v617, 0.0
        %vm650 = vcmp.ge.f32.partialorder %v618, 0.0
        %vm651 = vcmp.ge.f32.partialorder %v619, 0.0
        %vm652 = vcmp.ge.f32.partialorder %v620, 0.0
        %vm653 = vcmp.ge.f32.partialorder %v621, 0.0
        %vm654 = vcmp.ge.f32.partialorder %v622, 0.0
        %vm655 = vcmp.ge.f32.partialorder %v623, 0.0
        %vm656 = vcmp.ge.f32.partialorder %v624, 0.0
        %vm657 = vcmp.ge.f32.partialorder %v625, 0.0
        %vm658 = vcmp.ge.f32.partialorder %v626, 0.0
        %vm659 = vcmp.ge.f32.partialorder %v627, 0.0
        %vm660 = vcmp.ge.f32.partialorder %v628, 0.0
        %vm661 = vcmp.ge.f32.partialorder %v629, 0.0
        %vm662 = vcmp.ge.f32.partialorder %v630, 0.0
        %vm663 = vcmp.ge.f32.partialorder %v631, 0.0
        %vm664 = vcmp.ge.f32.partialorder %v632, 0.0
        %vm665 = vcmp.ge.f32.partialorder %v633, 0.0
        %vm666 = vcmp.ge.f32.partialorder %v634, 0.0
        %vm667 = vcmp.ge.f32.partialorder %v635, 0.0
        %vm668 = vcmp.ge.f32.partialorder %v636, 0.0
        %vm669 = vcmp.ge.f32.partialorder %v637, 0.0
        %vm670 = vcmp.ge.f32.partialorder %v638, 0.0
        %vm671 = vcmp.ge.f32.partialorder %v639, 0.0
        %vm672 = vcmp.ge.f32.partialorder %v640, 0.0
        %vm673 = vcmp.ge.f32.partialorder %v641, 0.0
        %vm674 = vcmp.ge.f32.partialorder %v642, 0.0
        %vm675 = vcmp.ge.f32.partialorder %v643, 0.0
        %v676 = vmul.f32 %v612, 0.01
        %v677 = vmul.f32 %v613, 0.01
        %v678 = vmul.f32 %v614, 0.01
        %v679 = vmul.f32 %v615, 0.01
        %v680 = vmul.f32 %v616, 0.01
        %v681 = vmul.f32 %v617, 0.01
        %v682 = vmul.f32 %v618, 0.01
        %v683 = vmul.f32 %v619, 0.01
        %v684 = vmul.f32 %v620, 0.01
        %v685 = vmul.f32 %v621, 0.01
        %v686 = vmul.f32 %v622, 0.01
        %v687 = vmul.f32 %v623, 0.01
        %v688 = vmul.f32 %v624, 0.01
        %v689 = vmul.f32 %v625, 0.01
        %v690 = vmul.f32 %v626, 0.01
        %v691 = vmul.f32 %v627, 0.01
        %v692 = vmul.f32 %v628, 0.01
        %v693 = vmul.f32 %v629, 0.01
        %v694 = vmul.f32 %v630, 0.01
        %v695 = vmul.f32 %v631, 0.01
        %v696 = vmul.f32 %v632, 0.01
        %v697 = vmul.f32 %v633, 0.01
        %v698 = vmul.f32 %v634, 0.01
        %v699 = vmul.f32 %v635, 0.01
        %v700 = vmul.f32 %v636, 0.01
        %v701 = vmul.f32 %v637, 0.01
        %v702 = vmul.f32 %v638, 0.01
        %v703 = vmul.f32 %v639, 0.01
        %v704 = vmul.f32 %v640, 0.01
        %v705 = vmul.f32 %v641, 0.01
        %v706 = vmul.f32 %v642, 0.01
        %v707 = vmul.f32 %v643, 0.01
        %v708 = vsel %vm644, %v612, %v676
        %v709 = vsel %vm645, %v613, %v677
        %v710 = vsel %vm646, %v614, %v678
        %v711 = vsel %vm647, %v615, %v679
        %v712 = vsel %vm648, %v616, %v680
        %v713 = vsel %vm649, %v617, %v681
        %v714 = vsel %vm650, %v618, %v682
        %v715 = vsel %vm651, %v619, %v683
        %v716 = vsel %vm652, %v620, %v684
        %v717 = vsel %vm653, %v621, %v685
        %v718 = vsel %vm654, %v622, %v686
        %v719 = vsel %vm655, %v623, %v687
        %v720 = vsel %vm656, %v624, %v688
        %v721 = vsel %vm657, %v625, %v689
        %v722 = vsel %vm658, %v626, %v690
        %v723 = vsel %vm659, %v627, %v691
        %v724 = vsel %vm660, %v628, %v692
        %v725 = vsel %vm661, %v629, %v693
        %v726 = vsel %vm662, %v630, %v694
        %v727 = vsel %vm663, %v631, %v695
        %v728 = vsel %vm664, %v632, %v696
        %v729 = vsel %vm665, %v633, %v697
        %v730 = vsel %vm666, %v634, %v698
        %v731 = vsel %vm667, %v635, %v699
        %v732 = vsel %vm668, %v636, %v700
        %v733 = vsel %vm669, %v637, %v701
        %v734 = vsel %vm670, %v638, %v702
        %v735 = vsel %vm671, %v639, %v703
        %v736 = vsel %vm672, %v640, %v704
        %v737 = vsel %vm673, %v641, %v705
        %v738 = vsel %vm674, %v642, %v706
        %v739 = vsel %vm675, %v643, %v707
        %s740 = scalar_lea.vmem [#allocation2], 128
        %v741 = vld [vmem:[%s740] sm:$0xff]
        %v742 = vld [vmem:[%s740 + $0x8] sm:$0xff]
        %v743 = vld [vmem:[%s740 + $0x10] sm:$0xff]
        %v744 = vld [vmem:[%s740 + $0x18] sm:$0xff]
        %v745 = vld [vmem:[%s740 + $0x20] sm:$0xff]
        %v746 = vld [vmem:[%s740 + $0x28] sm:$0xff]
        %v747 = vld [vmem:[%s740 + $0x30] sm:$0xff]
        %v748 = vld [vmem:[%s740 + $0x38] sm:$0xff]
        %v749 = vld [vmem:[%s740 + $0x40] sm:$0xff]
        %v750 = vld [vmem:[%s740 + $0x48] sm:$0xff]
        %v751 = vld [vmem:[%s740 + $0x50] sm:$0xff]
        %v752 = vld [vmem:[%s740 + $0x58] sm:$0xff]
        %v753 = vld [vmem:[%s740 + $0x60] sm:$0xff]
        %v754 = vld [vmem:[%s740 + $0x68] sm:$0xff]
        %v755 = vld [vmem:[%s740 + $0x70] sm:$0xff]
        %v756 = vld [vmem:[%s740 + $0x78] sm:$0xff]
        %v757 = vld [vmem:[%s2 + $0x1] sm:$0x1]
        %v758 = vperm.slane %v757, 0
        %759 = vmatpush.msra.mxu0 %v756
        %760 = vmatpush.msra.mxu0 %v755
        %761 = vmatpush.msra.mxu0 %v754
        %762 = vmatpush.msra.mxu0 %v753
        %763 = vmatpush.msra.mxu0 %v752
        %764 = vmatpush.msra.mxu0 %v751
        %765 = vmatpush.msra.mxu0 %v750
        %766 = vmatpush.msra.mxu0 %v749
        %767 = vmatpush.msra.mxu0 %v748
        %768 = vmatpush.msra.mxu0 %v747
        %769 = vmatpush.msra.mxu0 %v746
        %770 = vmatpush.msra.mxu0 %v745
        %771 = vmatpush.msra.mxu0 %v744
        %772 = vmatpush.msra.mxu0 %v743
        %773 = vmatpush.msra.mxu0 %v742
        %774 = vmatpush.msra.mxu0 %v741
        %775 = vmatmul.f32.gmra.mxu0 %v708
        %v776 = vpop.f32.mrf.mxu0
        %v777 = vadd.f32 %v758, %v776
        %778 = vmatmul.f32.gmra.mxu0 %v709
        %v779 = vpop.f32.mrf.mxu0
        %v780 = vadd.f32 %v758, %v779
        %781 = vmatmul.f32.gmra.mxu0 %v710
        %v782 = vpop.f32.mrf.mxu0
        %v783 = vadd.f32 %v758, %v782
        %784 = vmatmul.f32.gmra.mxu0 %v711
        %v785 = vpop.f32.mrf.mxu0
        %v786 = vadd.f32 %v758, %v785
        %787 = vmatmul.f32.gmra.mxu0 %v712
        %v788 = vpop.f32.mrf.mxu0
        %v789 = vadd.f32 %v758, %v788
        %790 = vmatmul.f32.gmra.mxu0 %v713
        %v791 = vpop.f32.mrf.mxu0
        %v792 = vadd.f32 %v758, %v791
        %793 = vmatmul.f32.gmra.mxu0 %v714
        %v794 = vpop.f32.mrf.mxu0
        %v795 = vadd.f32 %v758, %v794
        %796 = vmatmul.f32.gmra.mxu0 %v715
        %v797 = vpop.f32.mrf.mxu0
        %v798 = vadd.f32 %v758, %v797
        %799 = vmatmul.f32.gmra.mxu0 %v716
        %v800 = vpop.f32.mrf.mxu0
        %v801 = vadd.f32 %v758, %v800
        %802 = vmatmul.f32.gmra.mxu0 %v717
        %v803 = vpop.f32.mrf.mxu0
        %v804 = vadd.f32 %v758, %v803
        %805 = vmatmul.f32.gmra.mxu0 %v718
        %v806 = vpop.f32.mrf.mxu0
        %v807 = vadd.f32 %v758, %v806
        %808 = vmatmul.f32.gmra.mxu0 %v719
        %v809 = vpop.f32.mrf.mxu0
        %v810 = vadd.f32 %v758, %v809
        %811 = vmatmul.f32.gmra.mxu0 %v720
        %v812 = vpop.f32.mrf.mxu0
        %v813 = vadd.f32 %v758, %v812
        %814 = vmatmul.f32.gmra.mxu0 %v721
        %v815 = vpop.f32.mrf.mxu0
        %v816 = vadd.f32 %v758, %v815
        %817 = vmatmul.f32.gmra.mxu0 %v722
        %v818 = vpop.f32.mrf.mxu0
        %v819 = vadd.f32 %v758, %v818
        %820 = vmatmul.f32.gmra.mxu0 %v723
        %v821 = vpop.f32.mrf.mxu0
        %v822 = vadd.f32 %v758, %v821
        %823 = vmatmul.f32.gmra.mxu0 %v724
        %v824 = vpop.f32.mrf.mxu0
        %v825 = vadd.f32 %v758, %v824
        %826 = vmatmul.f32.gmra.mxu0 %v725
        %v827 = vpop.f32.mrf.mxu0
        %v828 = vadd.f32 %v758, %v827
        %829 = vmatmul.f32.gmra.mxu0 %v726
        %v830 = vpop.f32.mrf.mxu0
        %v831 = vadd.f32 %v758, %v830
        %832 = vmatmul.f32.gmra.mxu0 %v727
        %v833 = vpop.f32.mrf.mxu0
        %v834 = vadd.f32 %v758, %v833
        %835 = vmatmul.f32.gmra.mxu0 %v728
        %v836 = vpop.f32.mrf.mxu0
        %v837 = vadd.f32 %v758, %v836
        %838 = vmatmul.f32.gmra.mxu0 %v729
        %v839 = vpop.f32.mrf.mxu0
        %v840 = vadd.f32 %v758, %v839
        %841 = vmatmul.f32.gmra.mxu0 %v730
        %v842 = vpop.f32.mrf.mxu0
        %v843 = vadd.f32 %v758, %v842
        %844 = vmatmul.f32.gmra.mxu0 %v731
        %v845 = vpop.f32.mrf.mxu0
        %v846 = vadd.f32 %v758, %v845
        %847 = vmatmul.f32.gmra.mxu0 %v732
        %v848 = vpop.f32.mrf.mxu0
        %v849 = vadd.f32 %v758, %v848
        %850 = vmatmul.f32.gmra.mxu0 %v733
        %v851 = vpop.f32.mrf.mxu0
        %v852 = vadd.f32 %v758, %v851
        %853 = vmatmul.f32.gmra.mxu0 %v734
        %v854 = vpop.f32.mrf.mxu0
        %v855 = vadd.f32 %v758, %v854
        %856 = vmatmul.f32.gmra.mxu0 %v735
        %v857 = vpop.f32.mrf.mxu0
        %v858 = vadd.f32 %v758, %v857
        %859 = vmatmul.f32.gmra.mxu0 %v736
        %v860 = vpop.f32.mrf.mxu0
        %v861 = vadd.f32 %v758, %v860
        %862 = vmatmul.f32.gmra.mxu0 %v737
        %v863 = vpop.f32.mrf.mxu0
        %v864 = vadd.f32 %v758, %v863
        %865 = vmatmul.f32.gmra.mxu0 %v738
        %v866 = vpop.f32.mrf.mxu0
        %v867 = vadd.f32 %v758, %v866
        %868 = vmatmul.f32.gmra.mxu0 %v739
        %v869 = vpop.f32.mrf.mxu0
        %v870 = vadd.f32 %v758, %v869
        %871 = vdwg.mxu0
        %vm872 = vcmp.ge.f32.partialorder %v777, 0.0
        %vm873 = vcmp.ge.f32.partialorder %v780, 0.0
        %vm874 = vcmp.ge.f32.partialorder %v783, 0.0
        %vm875 = vcmp.ge.f32.partialorder %v786, 0.0
        %vm876 = vcmp.ge.f32.partialorder %v789, 0.0
        %vm877 = vcmp.ge.f32.partialorder %v792, 0.0
        %vm878 = vcmp.ge.f32.partialorder %v795, 0.0
        %vm879 = vcmp.ge.f32.partialorder %v798, 0.0
        %vm880 = vcmp.ge.f32.partialorder %v801, 0.0
        %vm881 = vcmp.ge.f32.partialorder %v804, 0.0
        %vm882 = vcmp.ge.f32.partialorder %v807, 0.0
        %vm883 = vcmp.ge.f32.partialorder %v810, 0.0
        %vm884 = vcmp.ge.f32.partialorder %v813, 0.0
        %vm885 = vcmp.ge.f32.partialorder %v816, 0.0
        %vm886 = vcmp.ge.f32.partialorder %v819, 0.0
        %vm887 = vcmp.ge.f32.partialorder %v822, 0.0
        %vm888 = vcmp.ge.f32.partialorder %v825, 0.0
        %vm889 = vcmp.ge.f32.partialorder %v828, 0.0
        %vm890 = vcmp.ge.f32.partialorder %v831, 0.0
        %vm891 = vcmp.ge.f32.partialorder %v834, 0.0
        %vm892 = vcmp.ge.f32.partialorder %v837, 0.0
        %vm893 = vcmp.ge.f32.partialorder %v840, 0.0
        %vm894 = vcmp.ge.f32.partialorder %v843, 0.0
        %vm895 = vcmp.ge.f32.partialorder %v846, 0.0
        %vm896 = vcmp.ge.f32.partialorder %v849, 0.0
        %vm897 = vcmp.ge.f32.partialorder %v852, 0.0
        %vm898 = vcmp.ge.f32.partialorder %v855, 0.0
        %vm899 = vcmp.ge.f32.partialorder %v858, 0.0
        %vm900 = vcmp.ge.f32.partialorder %v861, 0.0
        %vm901 = vcmp.ge.f32.partialorder %v864, 0.0
        %vm902 = vcmp.ge.f32.partialorder %v867, 0.0
        %vm903 = vcmp.ge.f32.partialorder %v870, 0.0
        %v904 = vmul.f32 %v777, 0.01
        %v905 = vmul.f32 %v780, 0.01
        %v906 = vmul.f32 %v783, 0.01
        %v907 = vmul.f32 %v786, 0.01
        %v908 = vmul.f32 %v789, 0.01
        %v909 = vmul.f32 %v792, 0.01
        %v910 = vmul.f32 %v795, 0.01
        %v911 = vmul.f32 %v798, 0.01
        %v912 = vmul.f32 %v801, 0.01
        %v913 = vmul.f32 %v804, 0.01
        %v914 = vmul.f32 %v807, 0.01
        %v915 = vmul.f32 %v810, 0.01
        %v916 = vmul.f32 %v813, 0.01
        %v917 = vmul.f32 %v816, 0.01
        %v918 = vmul.f32 %v819, 0.01
        %v919 = vmul.f32 %v822, 0.01
        %v920 = vmul.f32 %v825, 0.01
        %v921 = vmul.f32 %v828, 0.01
        %v922 = vmul.f32 %v831, 0.01
        %v923 = vmul.f32 %v834, 0.01
        %v924 = vmul.f32 %v837, 0.01
        %v925 = vmul.f32 %v840, 0.01
        %v926 = vmul.f32 %v843, 0.01
        %v927 = vmul.f32 %v846, 0.01
        %v928 = vmul.f32 %v849, 0.01
        %v929 = vmul.f32 %v852, 0.01
        %v930 = vmul.f32 %v855, 0.01
        %v931 = vmul.f32 %v858, 0.01
        %v932 = vmul.f32 %v861, 0.01
        %v933 = vmul.f32 %v864, 0.01
        %v934 = vmul.f32 %v867, 0.01
        %v935 = vmul.f32 %v870, 0.01
        %v936 = vsel %vm872, %v777, %v904
        %v937 = vsel %vm873, %v780, %v905
        %v938 = vsel %vm874, %v783, %v906
        %v939 = vsel %vm875, %v786, %v907
        %v940 = vsel %vm876, %v789, %v908
        %v941 = vsel %vm877, %v792, %v909
        %v942 = vsel %vm878, %v795, %v910
        %v943 = vsel %vm879, %v798, %v911
        %v944 = vsel %vm880, %v801, %v912
        %v945 = vsel %vm881, %v804, %v913
        %v946 = vsel %vm882, %v807, %v914
        %v947 = vsel %vm883, %v810, %v915
        %v948 = vsel %vm884, %v813, %v916
        %v949 = vsel %vm885, %v816, %v917
        %v950 = vsel %vm886, %v819, %v918
        %v951 = vsel %vm887, %v822, %v919
        %v952 = vsel %vm888, %v825, %v920
        %v953 = vsel %vm889, %v828, %v921
        %v954 = vsel %vm890, %v831, %v922
        %v955 = vsel %vm891, %v834, %v923
        %v956 = vsel %vm892, %v837, %v924
        %v957 = vsel %vm893, %v840, %v925
        %v958 = vsel %vm894, %v843, %v926
        %v959 = vsel %vm895, %v846, %v927
        %v960 = vsel %vm896, %v849, %v928
        %v961 = vsel %vm897, %v852, %v929
        %v962 = vsel %vm898, %v855, %v930
        %v963 = vsel %vm899, %v858, %v931
        %v964 = vsel %vm900, %v861, %v932
        %v965 = vsel %vm901, %v864, %v933
        %v966 = vsel %vm902, %v867, %v934
        %v967 = vsel %vm903, %v870, %v935
        %s968 = scalar_lea.vmem [#allocation2], 256
        %v969 = vld [vmem:[%s968] sm:$0xff]
        %v970 = vld [vmem:[%s968 + $0x8] sm:$0xff]
        %v971 = vld [vmem:[%s968 + $0x10] sm:$0xff]
        %v972 = vld [vmem:[%s968 + $0x18] sm:$0xff]
        %v973 = vld [vmem:[%s968 + $0x20] sm:$0xff]
        %v974 = vld [vmem:[%s968 + $0x28] sm:$0xff]
        %v975 = vld [vmem:[%s968 + $0x30] sm:$0xff]
        %v976 = vld [vmem:[%s968 + $0x38] sm:$0xff]
        %v977 = vld [vmem:[%s968 + $0x40] sm:$0xff]
        %v978 = vld [vmem:[%s968 + $0x48] sm:$0xff]
        %v979 = vld [vmem:[%s968 + $0x50] sm:$0xff]
        %v980 = vld [vmem:[%s968 + $0x58] sm:$0xff]
        %v981 = vld [vmem:[%s968 + $0x60] sm:$0xff]
        %v982 = vld [vmem:[%s968 + $0x68] sm:$0xff]
        %v983 = vld [vmem:[%s968 + $0x70] sm:$0xff]
        %v984 = vld [vmem:[%s968 + $0x78] sm:$0xff]
        %v985 = vld [vmem:[%s2 + $0x2] sm:$0x1]
        %v986 = vperm.slane %v985, 0
        %987 = vmatpush.msra.mxu0 %v984
        %988 = vmatpush.msra.mxu0 %v983
        %989 = vmatpush.msra.mxu0 %v982
        %990 = vmatpush.msra.mxu0 %v981
        %991 = vmatpush.msra.mxu0 %v980
        %992 = vmatpush.msra.mxu0 %v979
        %993 = vmatpush.msra.mxu0 %v978
        %994 = vmatpush.msra.mxu0 %v977
        %995 = vmatpush.msra.mxu0 %v976
        %996 = vmatpush.msra.mxu0 %v975
        %997 = vmatpush.msra.mxu0 %v974
        %998 = vmatpush.msra.mxu0 %v973
        %999 = vmatpush.msra.mxu0 %v972
        %1000 = vmatpush.msra.mxu0 %v971
        %1001 = vmatpush.msra.mxu0 %v970
        %1002 = vmatpush.msra.mxu0 %v969
        %1003 = vmatmul.f32.gmra.mxu0 %v936
        %v1004 = vpop.f32.mrf.mxu0
        %v1005 = vadd.f32 %v986, %v1004
        %1006 = vmatmul.f32.gmra.mxu0 %v937
        %v1007 = vpop.f32.mrf.mxu0
        %v1008 = vadd.f32 %v986, %v1007
        %1009 = vmatmul.f32.gmra.mxu0 %v938
        %v1010 = vpop.f32.mrf.mxu0
        %v1011 = vadd.f32 %v986, %v1010
        %1012 = vmatmul.f32.gmra.mxu0 %v939
        %v1013 = vpop.f32.mrf.mxu0
        %v1014 = vadd.f32 %v986, %v1013
        %1015 = vmatmul.f32.gmra.mxu0 %v940
        %v1016 = vpop.f32.mrf.mxu0
        %v1017 = vadd.f32 %v986, %v1016
        %1018 = vmatmul.f32.gmra.mxu0 %v941
        %v1019 = vpop.f32.mrf.mxu0
        %v1020 = vadd.f32 %v986, %v1019
        %1021 = vmatmul.f32.gmra.mxu0 %v942
        %v1022 = vpop.f32.mrf.mxu0
        %v1023 = vadd.f32 %v986, %v1022
        %1024 = vmatmul.f32.gmra.mxu0 %v943
        %v1025 = vpop.f32.mrf.mxu0
        %v1026 = vadd.f32 %v986, %v1025
        %1027 = vmatmul.f32.gmra.mxu0 %v944
        %v1028 = vpop.f32.mrf.mxu0
        %v1029 = vadd.f32 %v986, %v1028
        %1030 = vmatmul.f32.gmra.mxu0 %v945
        %v1031 = vpop.f32.mrf.mxu0
        %v1032 = vadd.f32 %v986, %v1031
        %1033 = vmatmul.f32.gmra.mxu0 %v946
        %v1034 = vpop.f32.mrf.mxu0
        %v1035 = vadd.f32 %v986, %v1034
        %1036 = vmatmul.f32.gmra.mxu0 %v947
        %v1037 = vpop.f32.mrf.mxu0
        %v1038 = vadd.f32 %v986, %v1037
        %1039 = vmatmul.f32.gmra.mxu0 %v948
        %v1040 = vpop.f32.mrf.mxu0
        %v1041 = vadd.f32 %v986, %v1040
        %1042 = vmatmul.f32.gmra.mxu0 %v949
        %v1043 = vpop.f32.mrf.mxu0
        %v1044 = vadd.f32 %v986, %v1043
        %1045 = vmatmul.f32.gmra.mxu0 %v950
        %v1046 = vpop.f32.mrf.mxu0
        %v1047 = vadd.f32 %v986, %v1046
        %1048 = vmatmul.f32.gmra.mxu0 %v951
        %v1049 = vpop.f32.mrf.mxu0
        %v1050 = vadd.f32 %v986, %v1049
        %1051 = vmatmul.f32.gmra.mxu0 %v952
        %v1052 = vpop.f32.mrf.mxu0
        %v1053 = vadd.f32 %v986, %v1052
        %1054 = vmatmul.f32.gmra.mxu0 %v953
        %v1055 = vpop.f32.mrf.mxu0
        %v1056 = vadd.f32 %v986, %v1055
        %1057 = vmatmul.f32.gmra.mxu0 %v954
        %v1058 = vpop.f32.mrf.mxu0
        %v1059 = vadd.f32 %v986, %v1058
        %1060 = vmatmul.f32.gmra.mxu0 %v955
        %v1061 = vpop.f32.mrf.mxu0
        %v1062 = vadd.f32 %v986, %v1061
        %1063 = vmatmul.f32.gmra.mxu0 %v956
        %v1064 = vpop.f32.mrf.mxu0
        %v1065 = vadd.f32 %v986, %v1064
        %1066 = vmatmul.f32.gmra.mxu0 %v957
        %v1067 = vpop.f32.mrf.mxu0
        %v1068 = vadd.f32 %v986, %v1067
        %1069 = vmatmul.f32.gmra.mxu0 %v958
        %v1070 = vpop.f32.mrf.mxu0
        %v1071 = vadd.f32 %v986, %v1070
        %1072 = vmatmul.f32.gmra.mxu0 %v959
        %v1073 = vpop.f32.mrf.mxu0
        %v1074 = vadd.f32 %v986, %v1073
        %1075 = vmatmul.f32.gmra.mxu0 %v960
        %v1076 = vpop.f32.mrf.mxu0
        %v1077 = vadd.f32 %v986, %v1076
        %1078 = vmatmul.f32.gmra.mxu0 %v961
        %v1079 = vpop.f32.mrf.mxu0
        %v1080 = vadd.f32 %v986, %v1079
        %1081 = vmatmul.f32.gmra.mxu0 %v962
        %v1082 = vpop.f32.mrf.mxu0
        %v1083 = vadd.f32 %v986, %v1082
        %1084 = vmatmul.f32.gmra.mxu0 %v963
        %v1085 = vpop.f32.mrf.mxu0
        %v1086 = vadd.f32 %v986, %v1085
        %1087 = vmatmul.f32.gmra.mxu0 %v964
        %v1088 = vpop.f32.mrf.mxu0
        %v1089 = vadd.f32 %v986, %v1088
        %1090 = vmatmul.f32.gmra.mxu0 %v965
        %v1091 = vpop.f32.mrf.mxu0
        %v1092 = vadd.f32 %v986, %v1091
        %1093 = vmatmul.f32.gmra.mxu0 %v966
        %v1094 = vpop.f32.mrf.mxu0
        %v1095 = vadd.f32 %v986, %v1094
        %1096 = vmatmul.f32.gmra.mxu0 %v967
        %v1097 = vpop.f32.mrf.mxu0
        %v1098 = vadd.f32 %v986, %v1097
        %1099 = vdwg.mxu0
        %vm1100 = vcmp.ge.f32.partialorder %v1005, 0.0
        %vm1101 = vcmp.ge.f32.partialorder %v1008, 0.0
        %vm1102 = vcmp.ge.f32.partialorder %v1011, 0.0
        %vm1103 = vcmp.ge.f32.partialorder %v1014, 0.0
        %vm1104 = vcmp.ge.f32.partialorder %v1017, 0.0
        %vm1105 = vcmp.ge.f32.partialorder %v1020, 0.0
        %vm1106 = vcmp.ge.f32.partialorder %v1023, 0.0
        %vm1107 = vcmp.ge.f32.partialorder %v1026, 0.0
        %vm1108 = vcmp.ge.f32.partialorder %v1029, 0.0
        %vm1109 = vcmp.ge.f32.partialorder %v1032, 0.0
        %vm1110 = vcmp.ge.f32.partialorder %v1035, 0.0
        %vm1111 = vcmp.ge.f32.partialorder %v1038, 0.0
        %vm1112 = vcmp.ge.f32.partialorder %v1041, 0.0
        %vm1113 = vcmp.ge.f32.partialorder %v1044, 0.0
        %vm1114 = vcmp.ge.f32.partialorder %v1047, 0.0
        %vm1115 = vcmp.ge.f32.partialorder %v1050, 0.0
        %vm1116 = vcmp.ge.f32.partialorder %v1053, 0.0
        %vm1117 = vcmp.ge.f32.partialorder %v1056, 0.0
        %vm1118 = vcmp.ge.f32.partialorder %v1059, 0.0
        %vm1119 = vcmp.ge.f32.partialorder %v1062, 0.0
        %vm1120 = vcmp.ge.f32.partialorder %v1065, 0.0
        %vm1121 = vcmp.ge.f32.partialorder %v1068, 0.0
        %vm1122 = vcmp.ge.f32.partialorder %v1071, 0.0
        %vm1123 = vcmp.ge.f32.partialorder %v1074, 0.0
        %vm1124 = vcmp.ge.f32.partialorder %v1077, 0.0
        %vm1125 = vcmp.ge.f32.partialorder %v1080, 0.0
        %vm1126 = vcmp.ge.f32.partialorder %v1083, 0.0
        %vm1127 = vcmp.ge.f32.partialorder %v1086, 0.0
        %vm1128 = vcmp.ge.f32.partialorder %v1089, 0.0
        %vm1129 = vcmp.ge.f32.partialorder %v1092, 0.0
        %vm1130 = vcmp.ge.f32.partialorder %v1095, 0.0
        %vm1131 = vcmp.ge.f32.partialorder %v1098, 0.0
        %v1132 = vmul.f32 %v1005, 0.01
        %v1133 = vmul.f32 %v1008, 0.01
        %v1134 = vmul.f32 %v1011, 0.01
        %v1135 = vmul.f32 %v1014, 0.01
        %v1136 = vmul.f32 %v1017, 0.01
        %v1137 = vmul.f32 %v1020, 0.01
        %v1138 = vmul.f32 %v1023, 0.01
        %v1139 = vmul.f32 %v1026, 0.01
        %v1140 = vmul.f32 %v1029, 0.01
        %v1141 = vmul.f32 %v1032, 0.01
        %v1142 = vmul.f32 %v1035, 0.01
        %v1143 = vmul.f32 %v1038, 0.01
        %v1144 = vmul.f32 %v1041, 0.01
        %v1145 = vmul.f32 %v1044, 0.01
        %v1146 = vmul.f32 %v1047, 0.01
        %v1147 = vmul.f32 %v1050, 0.01
        %v1148 = vmul.f32 %v1053, 0.01
        %v1149 = vmul.f32 %v1056, 0.01
        %v1150 = vmul.f32 %v1059, 0.01
        %v1151 = vmul.f32 %v1062, 0.01
        %v1152 = vmul.f32 %v1065, 0.01
        %v1153 = vmul.f32 %v1068, 0.01
        %v1154 = vmul.f32 %v1071, 0.01
        %v1155 = vmul.f32 %v1074, 0.01
        %v1156 = vmul.f32 %v1077, 0.01
        %v1157 = vmul.f32 %v1080, 0.01
        %v1158 = vmul.f32 %v1083, 0.01
        %v1159 = vmul.f32 %v1086, 0.01
        %v1160 = vmul.f32 %v1089, 0.01
        %v1161 = vmul.f32 %v1092, 0.01
        %v1162 = vmul.f32 %v1095, 0.01
        %v1163 = vmul.f32 %v1098, 0.01
        %v1164 = vsel %vm1100, %v1005, %v1132
        %v1165 = vsel %vm1101, %v1008, %v1133
        %v1166 = vsel %vm1102, %v1011, %v1134
        %v1167 = vsel %vm1103, %v1014, %v1135
        %v1168 = vsel %vm1104, %v1017, %v1136
        %v1169 = vsel %vm1105, %v1020, %v1137
        %v1170 = vsel %vm1106, %v1023, %v1138
        %v1171 = vsel %vm1107, %v1026, %v1139
        %v1172 = vsel %vm1108, %v1029, %v1140
        %v1173 = vsel %vm1109, %v1032, %v1141
        %v1174 = vsel %vm1110, %v1035, %v1142
        %v1175 = vsel %vm1111, %v1038, %v1143
        %v1176 = vsel %vm1112, %v1041, %v1144
        %v1177 = vsel %vm1113, %v1044, %v1145
        %v1178 = vsel %vm1114, %v1047, %v1146
        %v1179 = vsel %vm1115, %v1050, %v1147
        %v1180 = vsel %vm1116, %v1053, %v1148
        %v1181 = vsel %vm1117, %v1056, %v1149
        %v1182 = vsel %vm1118, %v1059, %v1150
        %v1183 = vsel %vm1119, %v1062, %v1151
        %v1184 = vsel %vm1120, %v1065, %v1152
        %v1185 = vsel %vm1121, %v1068, %v1153
        %v1186 = vsel %vm1122, %v1071, %v1154
        %v1187 = vsel %vm1123, %v1074, %v1155
        %v1188 = vsel %vm1124, %v1077, %v1156
        %v1189 = vsel %vm1125, %v1080, %v1157
        %v1190 = vsel %vm1126, %v1083, %v1158
        %v1191 = vsel %vm1127, %v1086, %v1159
        %v1192 = vsel %vm1128, %v1089, %v1160
        %v1193 = vsel %vm1129, %v1092, %v1161
        %v1194 = vsel %vm1130, %v1095, %v1162
        %v1195 = vsel %vm1131, %v1098, %v1163
        %s1196 = scalar_lea.vmem [#allocation2], 384
        %v1197 = vld [vmem:[%s1196] sm:$0xff]
        %v1198 = vld [vmem:[%s1196 + $0x8] sm:$0xff]
        %v1199 = vld [vmem:[%s1196 + $0x10] sm:$0xff]
        %v1200 = vld [vmem:[%s1196 + $0x18] sm:$0xff]
        %v1201 = vld [vmem:[%s1196 + $0x20] sm:$0xff]
        %v1202 = vld [vmem:[%s1196 + $0x28] sm:$0xff]
        %v1203 = vld [vmem:[%s1196 + $0x30] sm:$0xff]
        %v1204 = vld [vmem:[%s1196 + $0x38] sm:$0xff]
        %v1205 = vld [vmem:[%s1196 + $0x40] sm:$0xff]
        %v1206 = vld [vmem:[%s1196 + $0x48] sm:$0xff]
        %v1207 = vld [vmem:[%s1196 + $0x50] sm:$0xff]
        %v1208 = vld [vmem:[%s1196 + $0x58] sm:$0xff]
        %v1209 = vld [vmem:[%s1196 + $0x60] sm:$0xff]
        %v1210 = vld [vmem:[%s1196 + $0x68] sm:$0xff]
        %v1211 = vld [vmem:[%s1196 + $0x70] sm:$0xff]
        %v1212 = vld [vmem:[%s1196 + $0x78] sm:$0xff]
        %v1213 = vld [vmem:[%s2 + $0x3] sm:$0x1]
        %v1214 = vperm.slane %v1213, 0
        %1215 = vmatpush.msra.mxu0 %v1212
        %1216 = vmatpush.msra.mxu0 %v1211
        %1217 = vmatpush.msra.mxu0 %v1210
        %1218 = vmatpush.msra.mxu0 %v1209
        %1219 = vmatpush.msra.mxu0 %v1208
        %1220 = vmatpush.msra.mxu0 %v1207
        %1221 = vmatpush.msra.mxu0 %v1206
        %1222 = vmatpush.msra.mxu0 %v1205
        %1223 = vmatpush.msra.mxu0 %v1204
        %1224 = vmatpush.msra.mxu0 %v1203
        %1225 = vmatpush.msra.mxu0 %v1202
        %1226 = vmatpush.msra.mxu0 %v1201
        %1227 = vmatpush.msra.mxu0 %v1200
        %1228 = vmatpush.msra.mxu0 %v1199
        %1229 = vmatpush.msra.mxu0 %v1198
        %1230 = vmatpush.msra.mxu0 %v1197
        %1231 = vmatmul.f32.gmra.mxu0 %v1164
        %v1232 = vpop.f32.mrf.mxu0
        %v1233 = vadd.f32 %v1214, %v1232
        %1234 = vmatmul.f32.gmra.mxu0 %v1165
        %v1235 = vpop.f32.mrf.mxu0
        %v1236 = vadd.f32 %v1214, %v1235
        %1237 = vmatmul.f32.gmra.mxu0 %v1166
        %v1238 = vpop.f32.mrf.mxu0
        %v1239 = vadd.f32 %v1214, %v1238
        %1240 = vmatmul.f32.gmra.mxu0 %v1167
        %v1241 = vpop.f32.mrf.mxu0
        %v1242 = vadd.f32 %v1214, %v1241
        %1243 = vmatmul.f32.gmra.mxu0 %v1168
        %v1244 = vpop.f32.mrf.mxu0
        %v1245 = vadd.f32 %v1214, %v1244
        %1246 = vmatmul.f32.gmra.mxu0 %v1169
        %v1247 = vpop.f32.mrf.mxu0
        %v1248 = vadd.f32 %v1214, %v1247
        %1249 = vmatmul.f32.gmra.mxu0 %v1170
        %v1250 = vpop.f32.mrf.mxu0
        %v1251 = vadd.f32 %v1214, %v1250
        %1252 = vmatmul.f32.gmra.mxu0 %v1171
        %v1253 = vpop.f32.mrf.mxu0
        %v1254 = vadd.f32 %v1214, %v1253
        %1255 = vmatmul.f32.gmra.mxu0 %v1172
        %v1256 = vpop.f32.mrf.mxu0
        %v1257 = vadd.f32 %v1214, %v1256
        %1258 = vmatmul.f32.gmra.mxu0 %v1173
        %v1259 = vpop.f32.mrf.mxu0
        %v1260 = vadd.f32 %v1214, %v1259
        %1261 = vmatmul.f32.gmra.mxu0 %v1174
        %v1262 = vpop.f32.mrf.mxu0
        %v1263 = vadd.f32 %v1214, %v1262
        %1264 = vmatmul.f32.gmra.mxu0 %v1175
        %v1265 = vpop.f32.mrf.mxu0
        %v1266 = vadd.f32 %v1214, %v1265
        %1267 = vmatmul.f32.gmra.mxu0 %v1176
        %v1268 = vpop.f32.mrf.mxu0
        %v1269 = vadd.f32 %v1214, %v1268
        %1270 = vmatmul.f32.gmra.mxu0 %v1177
        %v1271 = vpop.f32.mrf.mxu0
        %v1272 = vadd.f32 %v1214, %v1271
        %1273 = vmatmul.f32.gmra.mxu0 %v1178
        %v1274 = vpop.f32.mrf.mxu0
        %v1275 = vadd.f32 %v1214, %v1274
        %1276 = vmatmul.f32.gmra.mxu0 %v1179
        %v1277 = vpop.f32.mrf.mxu0
        %v1278 = vadd.f32 %v1214, %v1277
        %1279 = vmatmul.f32.gmra.mxu0 %v1180
        %v1280 = vpop.f32.mrf.mxu0
        %v1281 = vadd.f32 %v1214, %v1280
        %1282 = vmatmul.f32.gmra.mxu0 %v1181
        %v1283 = vpop.f32.mrf.mxu0
        %v1284 = vadd.f32 %v1214, %v1283
        %1285 = vmatmul.f32.gmra.mxu0 %v1182
        %v1286 = vpop.f32.mrf.mxu0
        %v1287 = vadd.f32 %v1214, %v1286
        %1288 = vmatmul.f32.gmra.mxu0 %v1183
        %v1289 = vpop.f32.mrf.mxu0
        %v1290 = vadd.f32 %v1214, %v1289
        %1291 = vmatmul.f32.gmra.mxu0 %v1184
        %v1292 = vpop.f32.mrf.mxu0
        %v1293 = vadd.f32 %v1214, %v1292
        %1294 = vmatmul.f32.gmra.mxu0 %v1185
        %v1295 = vpop.f32.mrf.mxu0
        %v1296 = vadd.f32 %v1214, %v1295
        %1297 = vmatmul.f32.gmra.mxu0 %v1186
        %v1298 = vpop.f32.mrf.mxu0
        %v1299 = vadd.f32 %v1214, %v1298
        %1300 = vmatmul.f32.gmra.mxu0 %v1187
        %v1301 = vpop.f32.mrf.mxu0
        %v1302 = vadd.f32 %v1214, %v1301
        %1303 = vmatmul.f32.gmra.mxu0 %v1188
        %v1304 = vpop.f32.mrf.mxu0
        %v1305 = vadd.f32 %v1214, %v1304
        %1306 = vmatmul.f32.gmra.mxu0 %v1189
        %v1307 = vpop.f32.mrf.mxu0
        %v1308 = vadd.f32 %v1214, %v1307
        %1309 = vmatmul.f32.gmra.mxu0 %v1190
        %v1310 = vpop.f32.mrf.mxu0
        %v1311 = vadd.f32 %v1214, %v1310
        %1312 = vmatmul.f32.gmra.mxu0 %v1191
        %v1313 = vpop.f32.mrf.mxu0
        %v1314 = vadd.f32 %v1214, %v1313
        %1315 = vmatmul.f32.gmra.mxu0 %v1192
        %v1316 = vpop.f32.mrf.mxu0
        %v1317 = vadd.f32 %v1214, %v1316
        %1318 = vmatmul.f32.gmra.mxu0 %v1193
        %v1319 = vpop.f32.mrf.mxu0
        %v1320 = vadd.f32 %v1214, %v1319
        %1321 = vmatmul.f32.gmra.mxu0 %v1194
        %v1322 = vpop.f32.mrf.mxu0
        %v1323 = vadd.f32 %v1214, %v1322
        %1324 = vmatmul.f32.gmra.mxu0 %v1195
        %v1325 = vpop.f32.mrf.mxu0
        %v1326 = vadd.f32 %v1214, %v1325
        %1327 = vdwg.mxu0
        %vm1328 = vcmp.ge.f32.partialorder %v1233, 0.0
        %vm1329 = vcmp.ge.f32.partialorder %v1236, 0.0
        %vm1330 = vcmp.ge.f32.partialorder %v1239, 0.0
        %vm1331 = vcmp.ge.f32.partialorder %v1242, 0.0
        %vm1332 = vcmp.ge.f32.partialorder %v1245, 0.0
        %vm1333 = vcmp.ge.f32.partialorder %v1248, 0.0
        %vm1334 = vcmp.ge.f32.partialorder %v1251, 0.0
        %vm1335 = vcmp.ge.f32.partialorder %v1254, 0.0
        %vm1336 = vcmp.ge.f32.partialorder %v1257, 0.0
        %vm1337 = vcmp.ge.f32.partialorder %v1260, 0.0
        %vm1338 = vcmp.ge.f32.partialorder %v1263, 0.0
        %vm1339 = vcmp.ge.f32.partialorder %v1266, 0.0
        %vm1340 = vcmp.ge.f32.partialorder %v1269, 0.0
        %vm1341 = vcmp.ge.f32.partialorder %v1272, 0.0
        %vm1342 = vcmp.ge.f32.partialorder %v1275, 0.0
        %vm1343 = vcmp.ge.f32.partialorder %v1278, 0.0
        %vm1344 = vcmp.ge.f32.partialorder %v1281, 0.0
        %vm1345 = vcmp.ge.f32.partialorder %v1284, 0.0
        %vm1346 = vcmp.ge.f32.partialorder %v1287, 0.0
        %vm1347 = vcmp.ge.f32.partialorder %v1290, 0.0
        %vm1348 = vcmp.ge.f32.partialorder %v1293, 0.0
        %vm1349 = vcmp.ge.f32.partialorder %v1296, 0.0
        %vm1350 = vcmp.ge.f32.partialorder %v1299, 0.0
        %vm1351 = vcmp.ge.f32.partialorder %v1302, 0.0
        %vm1352 = vcmp.ge.f32.partialorder %v1305, 0.0
        %vm1353 = vcmp.ge.f32.partialorder %v1308, 0.0
        %vm1354 = vcmp.ge.f32.partialorder %v1311, 0.0
        %vm1355 = vcmp.ge.f32.partialorder %v1314, 0.0
        %vm1356 = vcmp.ge.f32.partialorder %v1317, 0.0
        %vm1357 = vcmp.ge.f32.partialorder %v1320, 0.0
        %vm1358 = vcmp.ge.f32.partialorder %v1323, 0.0
        %vm1359 = vcmp.ge.f32.partialorder %v1326, 0.0
        %v1360 = vmul.f32 %v1233, 0.01
        %v1361 = vmul.f32 %v1236, 0.01
        %v1362 = vmul.f32 %v1239, 0.01
        %v1363 = vmul.f32 %v1242, 0.01
        %v1364 = vmul.f32 %v1245, 0.01
        %v1365 = vmul.f32 %v1248, 0.01
        %v1366 = vmul.f32 %v1251, 0.01
        %v1367 = vmul.f32 %v1254, 0.01
        %v1368 = vmul.f32 %v1257, 0.01
        %v1369 = vmul.f32 %v1260, 0.01
        %v1370 = vmul.f32 %v1263, 0.01
        %v1371 = vmul.f32 %v1266, 0.01
        %v1372 = vmul.f32 %v1269, 0.01
        %v1373 = vmul.f32 %v1272, 0.01
        %v1374 = vmul.f32 %v1275, 0.01
        %v1375 = vmul.f32 %v1278, 0.01
        %v1376 = vmul.f32 %v1281, 0.01
        %v1377 = vmul.f32 %v1284, 0.01
        %v1378 = vmul.f32 %v1287, 0.01
        %v1379 = vmul.f32 %v1290, 0.01
        %v1380 = vmul.f32 %v1293, 0.01
        %v1381 = vmul.f32 %v1296, 0.01
        %v1382 = vmul.f32 %v1299, 0.01
        %v1383 = vmul.f32 %v1302, 0.01
        %v1384 = vmul.f32 %v1305, 0.01
        %v1385 = vmul.f32 %v1308, 0.01
        %v1386 = vmul.f32 %v1311, 0.01
        %v1387 = vmul.f32 %v1314, 0.01
        %v1388 = vmul.f32 %v1317, 0.01
        %v1389 = vmul.f32 %v1320, 0.01
        %v1390 = vmul.f32 %v1323, 0.01
        %v1391 = vmul.f32 %v1326, 0.01
        %v1392 = vsel %vm1328, %v1233, %v1360
        %v1393 = vsel %vm1329, %v1236, %v1361
        %v1394 = vsel %vm1330, %v1239, %v1362
        %v1395 = vsel %vm1331, %v1242, %v1363
        %v1396 = vsel %vm1332, %v1245, %v1364
        %v1397 = vsel %vm1333, %v1248, %v1365
        %v1398 = vsel %vm1334, %v1251, %v1366
        %v1399 = vsel %vm1335, %v1254, %v1367
        %v1400 = vsel %vm1336, %v1257, %v1368
        %v1401 = vsel %vm1337, %v1260, %v1369
        %v1402 = vsel %vm1338, %v1263, %v1370
        %v1403 = vsel %vm1339, %v1266, %v1371
        %v1404 = vsel %vm1340, %v1269, %v1372
        %v1405 = vsel %vm1341, %v1272, %v1373
        %v1406 = vsel %vm1342, %v1275, %v1374
        %v1407 = vsel %vm1343, %v1278, %v1375
        %v1408 = vsel %vm1344, %v1281, %v1376
        %v1409 = vsel %vm1345, %v1284, %v1377
        %v1410 = vsel %vm1346, %v1287, %v1378
        %v1411 = vsel %vm1347, %v1290, %v1379
        %v1412 = vsel %vm1348, %v1293, %v1380
        %v1413 = vsel %vm1349, %v1296, %v1381
        %v1414 = vsel %vm1350, %v1299, %v1382
        %v1415 = vsel %vm1351, %v1302, %v1383
        %v1416 = vsel %vm1352, %v1305, %v1384
        %v1417 = vsel %vm1353, %v1308, %v1385
        %v1418 = vsel %vm1354, %v1311, %v1386
        %v1419 = vsel %vm1355, %v1314, %v1387
        %v1420 = vsel %vm1356, %v1317, %v1388
        %v1421 = vsel %vm1357, %v1320, %v1389
        %v1422 = vsel %vm1358, %v1323, %v1390
        %v1423 = vsel %vm1359, %v1326, %v1391
        %s1424 = scalar_lea.vmem [#allocation2], 512
        %v1425 = vld [vmem:[%s1424] sm:$0xff]
        %v1426 = vld [vmem:[%s1424 + $0x8] sm:$0xff]
        %v1427 = vld [vmem:[%s1424 + $0x10] sm:$0xff]
        %v1428 = vld [vmem:[%s1424 + $0x18] sm:$0xff]
        %v1429 = vld [vmem:[%s1424 + $0x20] sm:$0xff]
        %v1430 = vld [vmem:[%s1424 + $0x28] sm:$0xff]
        %v1431 = vld [vmem:[%s1424 + $0x30] sm:$0xff]
        %v1432 = vld [vmem:[%s1424 + $0x38] sm:$0xff]
        %v1433 = vld [vmem:[%s1424 + $0x40] sm:$0xff]
        %v1434 = vld [vmem:[%s1424 + $0x48] sm:$0xff]
        %v1435 = vld [vmem:[%s1424 + $0x50] sm:$0xff]
        %v1436 = vld [vmem:[%s1424 + $0x58] sm:$0xff]
        %v1437 = vld [vmem:[%s1424 + $0x60] sm:$0xff]
        %v1438 = vld [vmem:[%s1424 + $0x68] sm:$0xff]
        %v1439 = vld [vmem:[%s1424 + $0x70] sm:$0xff]
        %v1440 = vld [vmem:[%s1424 + $0x78] sm:$0xff]
        %v1441 = vld [vmem:[%s2 + $0x4] sm:$0x1]
        %v1442 = vperm.slane %v1441, 0
        %1443 = vmatpush.msra.mxu0 %v1440
        %1444 = vmatpush.msra.mxu0 %v1439
        %1445 = vmatpush.msra.mxu0 %v1438
        %1446 = vmatpush.msra.mxu0 %v1437
        %1447 = vmatpush.msra.mxu0 %v1436
        %1448 = vmatpush.msra.mxu0 %v1435
        %1449 = vmatpush.msra.mxu0 %v1434
        %1450 = vmatpush.msra.mxu0 %v1433
        %1451 = vmatpush.msra.mxu0 %v1432
        %1452 = vmatpush.msra.mxu0 %v1431
        %1453 = vmatpush.msra.mxu0 %v1430
        %1454 = vmatpush.msra.mxu0 %v1429
        %1455 = vmatpush.msra.mxu0 %v1428
        %1456 = vmatpush.msra.mxu0 %v1427
        %1457 = vmatpush.msra.mxu0 %v1426
        %1458 = vmatpush.msra.mxu0 %v1425
        %1459 = vmatmul.f32.gmra.mxu0 %v1392
        %v1460 = vpop.f32.mrf.mxu0
        %v1461 = vadd.f32 %v1442, %v1460
        %1462 = vmatmul.f32.gmra.mxu0 %v1393
        %v1463 = vpop.f32.mrf.mxu0
        %v1464 = vadd.f32 %v1442, %v1463
        %1465 = vmatmul.f32.gmra.mxu0 %v1394
        %v1466 = vpop.f32.mrf.mxu0
        %v1467 = vadd.f32 %v1442, %v1466
        %1468 = vmatmul.f32.gmra.mxu0 %v1395
        %v1469 = vpop.f32.mrf.mxu0
        %v1470 = vadd.f32 %v1442, %v1469
        %1471 = vmatmul.f32.gmra.mxu0 %v1396
        %v1472 = vpop.f32.mrf.mxu0
        %v1473 = vadd.f32 %v1442, %v1472
        %1474 = vmatmul.f32.gmra.mxu0 %v1397
        %v1475 = vpop.f32.mrf.mxu0
        %v1476 = vadd.f32 %v1442, %v1475
        %1477 = vmatmul.f32.gmra.mxu0 %v1398
        %v1478 = vpop.f32.mrf.mxu0
        %v1479 = vadd.f32 %v1442, %v1478
        %1480 = vmatmul.f32.gmra.mxu0 %v1399
        %v1481 = vpop.f32.mrf.mxu0
        %v1482 = vadd.f32 %v1442, %v1481
        %1483 = vmatmul.f32.gmra.mxu0 %v1400
        %v1484 = vpop.f32.mrf.mxu0
        %v1485 = vadd.f32 %v1442, %v1484
        %1486 = vmatmul.f32.gmra.mxu0 %v1401
        %v1487 = vpop.f32.mrf.mxu0
        %v1488 = vadd.f32 %v1442, %v1487
        %1489 = vmatmul.f32.gmra.mxu0 %v1402
        %v1490 = vpop.f32.mrf.mxu0
        %v1491 = vadd.f32 %v1442, %v1490
        %1492 = vmatmul.f32.gmra.mxu0 %v1403
        %v1493 = vpop.f32.mrf.mxu0
        %v1494 = vadd.f32 %v1442, %v1493
        %1495 = vmatmul.f32.gmra.mxu0 %v1404
        %v1496 = vpop.f32.mrf.mxu0
        %v1497 = vadd.f32 %v1442, %v1496
        %1498 = vmatmul.f32.gmra.mxu0 %v1405
        %v1499 = vpop.f32.mrf.mxu0
        %v1500 = vadd.f32 %v1442, %v1499
        %1501 = vmatmul.f32.gmra.mxu0 %v1406
        %v1502 = vpop.f32.mrf.mxu0
        %v1503 = vadd.f32 %v1442, %v1502
        %1504 = vmatmul.f32.gmra.mxu0 %v1407
        %v1505 = vpop.f32.mrf.mxu0
        %v1506 = vadd.f32 %v1442, %v1505
        %1507 = vmatmul.f32.gmra.mxu0 %v1408
        %v1508 = vpop.f32.mrf.mxu0
        %v1509 = vadd.f32 %v1442, %v1508
        %1510 = vmatmul.f32.gmra.mxu0 %v1409
        %v1511 = vpop.f32.mrf.mxu0
        %v1512 = vadd.f32 %v1442, %v1511
        %1513 = vmatmul.f32.gmra.mxu0 %v1410
        %v1514 = vpop.f32.mrf.mxu0
        %v1515 = vadd.f32 %v1442, %v1514
        %1516 = vmatmul.f32.gmra.mxu0 %v1411
        %v1517 = vpop.f32.mrf.mxu0
        %v1518 = vadd.f32 %v1442, %v1517
        %1519 = vmatmul.f32.gmra.mxu0 %v1412
        %v1520 = vpop.f32.mrf.mxu0
        %v1521 = vadd.f32 %v1442, %v1520
        %1522 = vmatmul.f32.gmra.mxu0 %v1413
        %v1523 = vpop.f32.mrf.mxu0
        %v1524 = vadd.f32 %v1442, %v1523
        %1525 = vmatmul.f32.gmra.mxu0 %v1414
        %v1526 = vpop.f32.mrf.mxu0
        %v1527 = vadd.f32 %v1442, %v1526
        %1528 = vmatmul.f32.gmra.mxu0 %v1415
        %v1529 = vpop.f32.mrf.mxu0
        %v1530 = vadd.f32 %v1442, %v1529
        %1531 = vmatmul.f32.gmra.mxu0 %v1416
        %v1532 = vpop.f32.mrf.mxu0
        %v1533 = vadd.f32 %v1442, %v1532
        %1534 = vmatmul.f32.gmra.mxu0 %v1417
        %v1535 = vpop.f32.mrf.mxu0
        %v1536 = vadd.f32 %v1442, %v1535
        %1537 = vmatmul.f32.gmra.mxu0 %v1418
        %v1538 = vpop.f32.mrf.mxu0
        %v1539 = vadd.f32 %v1442, %v1538
        %1540 = vmatmul.f32.gmra.mxu0 %v1419
        %v1541 = vpop.f32.mrf.mxu0
        %v1542 = vadd.f32 %v1442, %v1541
        %1543 = vmatmul.f32.gmra.mxu0 %v1420
        %v1544 = vpop.f32.mrf.mxu0
        %v1545 = vadd.f32 %v1442, %v1544
        %1546 = vmatmul.f32.gmra.mxu0 %v1421
        %v1547 = vpop.f32.mrf.mxu0
        %v1548 = vadd.f32 %v1442, %v1547
        %1549 = vmatmul.f32.gmra.mxu0 %v1422
        %v1550 = vpop.f32.mrf.mxu0
        %v1551 = vadd.f32 %v1442, %v1550
        %1552 = vmatmul.f32.gmra.mxu0 %v1423
        %v1553 = vpop.f32.mrf.mxu0
        %v1554 = vadd.f32 %v1442, %v1553
        %1555 = vdwg.mxu0
        %vm1556 = vcmp.ge.f32.partialorder %v1461, 0.0
        %vm1557 = vcmp.ge.f32.partialorder %v1464, 0.0
        %vm1558 = vcmp.ge.f32.partialorder %v1467, 0.0
        %vm1559 = vcmp.ge.f32.partialorder %v1470, 0.0
        %vm1560 = vcmp.ge.f32.partialorder %v1473, 0.0
        %vm1561 = vcmp.ge.f32.partialorder %v1476, 0.0
        %vm1562 = vcmp.ge.f32.partialorder %v1479, 0.0
        %vm1563 = vcmp.ge.f32.partialorder %v1482, 0.0
        %vm1564 = vcmp.ge.f32.partialorder %v1485, 0.0
        %vm1565 = vcmp.ge.f32.partialorder %v1488, 0.0
        %vm1566 = vcmp.ge.f32.partialorder %v1491, 0.0
        %vm1567 = vcmp.ge.f32.partialorder %v1494, 0.0
        %vm1568 = vcmp.ge.f32.partialorder %v1497, 0.0
        %vm1569 = vcmp.ge.f32.partialorder %v1500, 0.0
        %vm1570 = vcmp.ge.f32.partialorder %v1503, 0.0
        %vm1571 = vcmp.ge.f32.partialorder %v1506, 0.0
        %vm1572 = vcmp.ge.f32.partialorder %v1509, 0.0
        %vm1573 = vcmp.ge.f32.partialorder %v1512, 0.0
        %vm1574 = vcmp.ge.f32.partialorder %v1515, 0.0
        %vm1575 = vcmp.ge.f32.partialorder %v1518, 0.0
        %vm1576 = vcmp.ge.f32.partialorder %v1521, 0.0
        %vm1577 = vcmp.ge.f32.partialorder %v1524, 0.0
        %vm1578 = vcmp.ge.f32.partialorder %v1527, 0.0
        %vm1579 = vcmp.ge.f32.partialorder %v1530, 0.0
        %vm1580 = vcmp.ge.f32.partialorder %v1533, 0.0
        %vm1581 = vcmp.ge.f32.partialorder %v1536, 0.0
        %vm1582 = vcmp.ge.f32.partialorder %v1539, 0.0
        %vm1583 = vcmp.ge.f32.partialorder %v1542, 0.0
        %vm1584 = vcmp.ge.f32.partialorder %v1545, 0.0
        %vm1585 = vcmp.ge.f32.partialorder %v1548, 0.0
        %vm1586 = vcmp.ge.f32.partialorder %v1551, 0.0
        %vm1587 = vcmp.ge.f32.partialorder %v1554, 0.0
        %v1588 = vmul.f32 %v1461, 0.01
        %v1589 = vmul.f32 %v1464, 0.01
        %v1590 = vmul.f32 %v1467, 0.01
        %v1591 = vmul.f32 %v1470, 0.01
        %v1592 = vmul.f32 %v1473, 0.01
        %v1593 = vmul.f32 %v1476, 0.01
        %v1594 = vmul.f32 %v1479, 0.01
        %v1595 = vmul.f32 %v1482, 0.01
        %v1596 = vmul.f32 %v1485, 0.01
        %v1597 = vmul.f32 %v1488, 0.01
        %v1598 = vmul.f32 %v1491, 0.01
        %v1599 = vmul.f32 %v1494, 0.01
        %v1600 = vmul.f32 %v1497, 0.01
        %v1601 = vmul.f32 %v1500, 0.01
        %v1602 = vmul.f32 %v1503, 0.01
        %v1603 = vmul.f32 %v1506, 0.01
        %v1604 = vmul.f32 %v1509, 0.01
        %v1605 = vmul.f32 %v1512, 0.01
        %v1606 = vmul.f32 %v1515, 0.01
        %v1607 = vmul.f32 %v1518, 0.01
        %v1608 = vmul.f32 %v1521, 0.01
        %v1609 = vmul.f32 %v1524, 0.01
        %v1610 = vmul.f32 %v1527, 0.01
        %v1611 = vmul.f32 %v1530, 0.01
        %v1612 = vmul.f32 %v1533, 0.01
        %v1613 = vmul.f32 %v1536, 0.01
        %v1614 = vmul.f32 %v1539, 0.01
        %v1615 = vmul.f32 %v1542, 0.01
        %v1616 = vmul.f32 %v1545, 0.01
        %v1617 = vmul.f32 %v1548, 0.01
        %v1618 = vmul.f32 %v1551, 0.01
        %v1619 = vmul.f32 %v1554, 0.01
        %v1620 = vsel %vm1556, %v1461, %v1588
        %v1621 = vsel %vm1557, %v1464, %v1589
        %v1622 = vsel %vm1558, %v1467, %v1590
        %v1623 = vsel %vm1559, %v1470, %v1591
        %v1624 = vsel %vm1560, %v1473, %v1592
        %v1625 = vsel %vm1561, %v1476, %v1593
        %v1626 = vsel %vm1562, %v1479, %v1594
        %v1627 = vsel %vm1563, %v1482, %v1595
        %v1628 = vsel %vm1564, %v1485, %v1596
        %v1629 = vsel %vm1565, %v1488, %v1597
        %v1630 = vsel %vm1566, %v1491, %v1598
        %v1631 = vsel %vm1567, %v1494, %v1599
        %v1632 = vsel %vm1568, %v1497, %v1600
        %v1633 = vsel %vm1569, %v1500, %v1601
        %v1634 = vsel %vm1570, %v1503, %v1602
        %v1635 = vsel %vm1571, %v1506, %v1603
        %v1636 = vsel %vm1572, %v1509, %v1604
        %v1637 = vsel %vm1573, %v1512, %v1605
        %v1638 = vsel %vm1574, %v1515, %v1606
        %v1639 = vsel %vm1575, %v1518, %v1607
        %v1640 = vsel %vm1576, %v1521, %v1608
        %v1641 = vsel %vm1577, %v1524, %v1609
        %v1642 = vsel %vm1578, %v1527, %v1610
        %v1643 = vsel %vm1579, %v1530, %v1611
        %v1644 = vsel %vm1580, %v1533, %v1612
        %v1645 = vsel %vm1581, %v1536, %v1613
        %v1646 = vsel %vm1582, %v1539, %v1614
        %v1647 = vsel %vm1583, %v1542, %v1615
        %v1648 = vsel %vm1584, %v1545, %v1616
        %v1649 = vsel %vm1585, %v1548, %v1617
        %v1650 = vsel %vm1586, %v1551, %v1618
        %v1651 = vsel %vm1587, %v1554, %v1619
        %s1652 = scalar_lea.vmem [#allocation2], 640
        %v1653 = vld [vmem:[%s1652] sm:$0xff]
        %v1654 = vld [vmem:[%s1652 + $0x8] sm:$0xff]
        %v1655 = vld [vmem:[%s1652 + $0x10] sm:$0xff]
        %v1656 = vld [vmem:[%s1652 + $0x18] sm:$0xff]
        %v1657 = vld [vmem:[%s1652 + $0x20] sm:$0xff]
        %v1658 = vld [vmem:[%s1652 + $0x28] sm:$0xff]
        %v1659 = vld [vmem:[%s1652 + $0x30] sm:$0xff]
        %v1660 = vld [vmem:[%s1652 + $0x38] sm:$0xff]
        %v1661 = vld [vmem:[%s1652 + $0x40] sm:$0xff]
        %v1662 = vld [vmem:[%s1652 + $0x48] sm:$0xff]
        %v1663 = vld [vmem:[%s1652 + $0x50] sm:$0xff]
        %v1664 = vld [vmem:[%s1652 + $0x58] sm:$0xff]
        %v1665 = vld [vmem:[%s1652 + $0x60] sm:$0xff]
        %v1666 = vld [vmem:[%s1652 + $0x68] sm:$0xff]
        %v1667 = vld [vmem:[%s1652 + $0x70] sm:$0xff]
        %v1668 = vld [vmem:[%s1652 + $0x78] sm:$0xff]
        %v1669 = vld [vmem:[%s2 + $0x5] sm:$0x1]
        %v1670 = vperm.slane %v1669, 0
        %1671 = vmatpush.msra.mxu0 %v1668
        %1672 = vmatpush.msra.mxu0 %v1667
        %1673 = vmatpush.msra.mxu0 %v1666
        %1674 = vmatpush.msra.mxu0 %v1665
        %1675 = vmatpush.msra.mxu0 %v1664
        %1676 = vmatpush.msra.mxu0 %v1663
        %1677 = vmatpush.msra.mxu0 %v1662
        %1678 = vmatpush.msra.mxu0 %v1661
        %1679 = vmatpush.msra.mxu0 %v1660
        %1680 = vmatpush.msra.mxu0 %v1659
        %1681 = vmatpush.msra.mxu0 %v1658
        %1682 = vmatpush.msra.mxu0 %v1657
        %1683 = vmatpush.msra.mxu0 %v1656
        %1684 = vmatpush.msra.mxu0 %v1655
        %1685 = vmatpush.msra.mxu0 %v1654
        %1686 = vmatpush.msra.mxu0 %v1653
        %1687 = vmatmul.f32.gmra.mxu0 %v1620
        %v1688 = vpop.f32.mrf.mxu0
        %v1689 = vadd.f32 %v1670, %v1688
        %1690 = vmatmul.f32.gmra.mxu0 %v1621
        %v1691 = vpop.f32.mrf.mxu0
        %v1692 = vadd.f32 %v1670, %v1691
        %1693 = vmatmul.f32.gmra.mxu0 %v1622
        %v1694 = vpop.f32.mrf.mxu0
        %v1695 = vadd.f32 %v1670, %v1694
        %1696 = vmatmul.f32.gmra.mxu0 %v1623
        %v1697 = vpop.f32.mrf.mxu0
        %v1698 = vadd.f32 %v1670, %v1697
        %1699 = vmatmul.f32.gmra.mxu0 %v1624
        %v1700 = vpop.f32.mrf.mxu0
        %v1701 = vadd.f32 %v1670, %v1700
        %1702 = vmatmul.f32.gmra.mxu0 %v1625
        %v1703 = vpop.f32.mrf.mxu0
        %v1704 = vadd.f32 %v1670, %v1703
        %1705 = vmatmul.f32.gmra.mxu0 %v1626
        %v1706 = vpop.f32.mrf.mxu0
        %v1707 = vadd.f32 %v1670, %v1706
        %1708 = vmatmul.f32.gmra.mxu0 %v1627
        %v1709 = vpop.f32.mrf.mxu0
        %v1710 = vadd.f32 %v1670, %v1709
        %1711 = vmatmul.f32.gmra.mxu0 %v1628
        %v1712 = vpop.f32.mrf.mxu0
        %v1713 = vadd.f32 %v1670, %v1712
        %1714 = vmatmul.f32.gmra.mxu0 %v1629
        %v1715 = vpop.f32.mrf.mxu0
        %v1716 = vadd.f32 %v1670, %v1715
        %1717 = vmatmul.f32.gmra.mxu0 %v1630
        %v1718 = vpop.f32.mrf.mxu0
        %v1719 = vadd.f32 %v1670, %v1718
        %1720 = vmatmul.f32.gmra.mxu0 %v1631
        %v1721 = vpop.f32.mrf.mxu0
        %v1722 = vadd.f32 %v1670, %v1721
        %1723 = vmatmul.f32.gmra.mxu0 %v1632
        %v1724 = vpop.f32.mrf.mxu0
        %v1725 = vadd.f32 %v1670, %v1724
        %1726 = vmatmul.f32.gmra.mxu0 %v1633
        %v1727 = vpop.f32.mrf.mxu0
        %v1728 = vadd.f32 %v1670, %v1727
        %1729 = vmatmul.f32.gmra.mxu0 %v1634
        %v1730 = vpop.f32.mrf.mxu0
        %v1731 = vadd.f32 %v1670, %v1730
        %1732 = vmatmul.f32.gmra.mxu0 %v1635
        %v1733 = vpop.f32.mrf.mxu0
        %v1734 = vadd.f32 %v1670, %v1733
        %1735 = vmatmul.f32.gmra.mxu0 %v1636
        %v1736 = vpop.f32.mrf.mxu0
        %v1737 = vadd.f32 %v1670, %v1736
        %1738 = vmatmul.f32.gmra.mxu0 %v1637
        %v1739 = vpop.f32.mrf.mxu0
        %v1740 = vadd.f32 %v1670, %v1739
        %1741 = vmatmul.f32.gmra.mxu0 %v1638
        %v1742 = vpop.f32.mrf.mxu0
        %v1743 = vadd.f32 %v1670, %v1742
        %1744 = vmatmul.f32.gmra.mxu0 %v1639
        %v1745 = vpop.f32.mrf.mxu0
        %v1746 = vadd.f32 %v1670, %v1745
        %1747 = vmatmul.f32.gmra.mxu0 %v1640
        %v1748 = vpop.f32.mrf.mxu0
        %v1749 = vadd.f32 %v1670, %v1748
        %1750 = vmatmul.f32.gmra.mxu0 %v1641
        %v1751 = vpop.f32.mrf.mxu0
        %v1752 = vadd.f32 %v1670, %v1751
        %1753 = vmatmul.f32.gmra.mxu0 %v1642
        %v1754 = vpop.f32.mrf.mxu0
        %v1755 = vadd.f32 %v1670, %v1754
        %1756 = vmatmul.f32.gmra.mxu0 %v1643
        %v1757 = vpop.f32.mrf.mxu0
        %v1758 = vadd.f32 %v1670, %v1757
        %1759 = vmatmul.f32.gmra.mxu0 %v1644
        %v1760 = vpop.f32.mrf.mxu0
        %v1761 = vadd.f32 %v1670, %v1760
        %1762 = vmatmul.f32.gmra.mxu0 %v1645
        %v1763 = vpop.f32.mrf.mxu0
        %v1764 = vadd.f32 %v1670, %v1763
        %1765 = vmatmul.f32.gmra.mxu0 %v1646
        %v1766 = vpop.f32.mrf.mxu0
        %v1767 = vadd.f32 %v1670, %v1766
        %1768 = vmatmul.f32.gmra.mxu0 %v1647
        %v1769 = vpop.f32.mrf.mxu0
        %v1770 = vadd.f32 %v1670, %v1769
        %1771 = vmatmul.f32.gmra.mxu0 %v1648
        %v1772 = vpop.f32.mrf.mxu0
        %v1773 = vadd.f32 %v1670, %v1772
        %1774 = vmatmul.f32.gmra.mxu0 %v1649
        %v1775 = vpop.f32.mrf.mxu0
        %v1776 = vadd.f32 %v1670, %v1775
        %1777 = vmatmul.f32.gmra.mxu0 %v1650
        %v1778 = vpop.f32.mrf.mxu0
        %v1779 = vadd.f32 %v1670, %v1778
        %1780 = vmatmul.f32.gmra.mxu0 %v1651
        %v1781 = vpop.f32.mrf.mxu0
        %v1782 = vadd.f32 %v1670, %v1781
        %1783 = vdwg.mxu0
        %vm1784 = vcmp.ge.f32.partialorder %v1689, 0.0
        %vm1785 = vcmp.ge.f32.partialorder %v1692, 0.0
        %vm1786 = vcmp.ge.f32.partialorder %v1695, 0.0
        %vm1787 = vcmp.ge.f32.partialorder %v1698, 0.0
        %vm1788 = vcmp.ge.f32.partialorder %v1701, 0.0
        %vm1789 = vcmp.ge.f32.partialorder %v1704, 0.0
        %vm1790 = vcmp.ge.f32.partialorder %v1707, 0.0
        %vm1791 = vcmp.ge.f32.partialorder %v1710, 0.0
        %vm1792 = vcmp.ge.f32.partialorder %v1713, 0.0
        %vm1793 = vcmp.ge.f32.partialorder %v1716, 0.0
        %vm1794 = vcmp.ge.f32.partialorder %v1719, 0.0
        %vm1795 = vcmp.ge.f32.partialorder %v1722, 0.0
        %vm1796 = vcmp.ge.f32.partialorder %v1725, 0.0
        %vm1797 = vcmp.ge.f32.partialorder %v1728, 0.0
        %vm1798 = vcmp.ge.f32.partialorder %v1731, 0.0
        %vm1799 = vcmp.ge.f32.partialorder %v1734, 0.0
        %vm1800 = vcmp.ge.f32.partialorder %v1737, 0.0
        %vm1801 = vcmp.ge.f32.partialorder %v1740, 0.0
        %vm1802 = vcmp.ge.f32.partialorder %v1743, 0.0
        %vm1803 = vcmp.ge.f32.partialorder %v1746, 0.0
        %vm1804 = vcmp.ge.f32.partialorder %v1749, 0.0
        %vm1805 = vcmp.ge.f32.partialorder %v1752, 0.0
        %vm1806 = vcmp.ge.f32.partialorder %v1755, 0.0
        %vm1807 = vcmp.ge.f32.partialorder %v1758, 0.0
        %vm1808 = vcmp.ge.f32.partialorder %v1761, 0.0
        %vm1809 = vcmp.ge.f32.partialorder %v1764, 0.0
        %vm1810 = vcmp.ge.f32.partialorder %v1767, 0.0
        %vm1811 = vcmp.ge.f32.partialorder %v1770, 0.0
        %vm1812 = vcmp.ge.f32.partialorder %v1773, 0.0
        %vm1813 = vcmp.ge.f32.partialorder %v1776, 0.0
        %vm1814 = vcmp.ge.f32.partialorder %v1779, 0.0
        %vm1815 = vcmp.ge.f32.partialorder %v1782, 0.0
        %v1816 = vmul.f32 %v1689, 0.01
        %v1817 = vmul.f32 %v1692, 0.01
        %v1818 = vmul.f32 %v1695, 0.01
        %v1819 = vmul.f32 %v1698, 0.01
        %v1820 = vmul.f32 %v1701, 0.01
        %v1821 = vmul.f32 %v1704, 0.01
        %v1822 = vmul.f32 %v1707, 0.01
        %v1823 = vmul.f32 %v1710, 0.01
        %v1824 = vmul.f32 %v1713, 0.01
        %v1825 = vmul.f32 %v1716, 0.01
        %v1826 = vmul.f32 %v1719, 0.01
        %v1827 = vmul.f32 %v1722, 0.01
        %v1828 = vmul.f32 %v1725, 0.01
        %v1829 = vmul.f32 %v1728, 0.01
        %v1830 = vmul.f32 %v1731, 0.01
        %v1831 = vmul.f32 %v1734, 0.01
        %v1832 = vmul.f32 %v1737, 0.01
        %v1833 = vmul.f32 %v1740, 0.01
        %v1834 = vmul.f32 %v1743, 0.01
        %v1835 = vmul.f32 %v1746, 0.01
        %v1836 = vmul.f32 %v1749, 0.01
        %v1837 = vmul.f32 %v1752, 0.01
        %v1838 = vmul.f32 %v1755, 0.01
        %v1839 = vmul.f32 %v1758, 0.01
        %v1840 = vmul.f32 %v1761, 0.01
        %v1841 = vmul.f32 %v1764, 0.01
        %v1842 = vmul.f32 %v1767, 0.01
        %v1843 = vmul.f32 %v1770, 0.01
        %v1844 = vmul.f32 %v1773, 0.01
        %v1845 = vmul.f32 %v1776, 0.01
        %v1846 = vmul.f32 %v1779, 0.01
        %v1847 = vmul.f32 %v1782, 0.01
        %v1848 = vsel %vm1784, %v1689, %v1816
        %v1849 = vsel %vm1785, %v1692, %v1817
        %v1850 = vsel %vm1786, %v1695, %v1818
        %v1851 = vsel %vm1787, %v1698, %v1819
        %v1852 = vsel %vm1788, %v1701, %v1820
        %v1853 = vsel %vm1789, %v1704, %v1821
        %v1854 = vsel %vm1790, %v1707, %v1822
        %v1855 = vsel %vm1791, %v1710, %v1823
        %v1856 = vsel %vm1792, %v1713, %v1824
        %v1857 = vsel %vm1793, %v1716, %v1825
        %v1858 = vsel %vm1794, %v1719, %v1826
        %v1859 = vsel %vm1795, %v1722, %v1827
        %v1860 = vsel %vm1796, %v1725, %v1828
        %v1861 = vsel %vm1797, %v1728, %v1829
        %v1862 = vsel %vm1798, %v1731, %v1830
        %v1863 = vsel %vm1799, %v1734, %v1831
        %v1864 = vsel %vm1800, %v1737, %v1832
        %v1865 = vsel %vm1801, %v1740, %v1833
        %v1866 = vsel %vm1802, %v1743, %v1834
        %v1867 = vsel %vm1803, %v1746, %v1835
        %v1868 = vsel %vm1804, %v1749, %v1836
        %v1869 = vsel %vm1805, %v1752, %v1837
        %v1870 = vsel %vm1806, %v1755, %v1838
        %v1871 = vsel %vm1807, %v1758, %v1839
        %v1872 = vsel %vm1808, %v1761, %v1840
        %v1873 = vsel %vm1809, %v1764, %v1841
        %v1874 = vsel %vm1810, %v1767, %v1842
        %v1875 = vsel %vm1811, %v1770, %v1843
        %v1876 = vsel %vm1812, %v1773, %v1844
        %v1877 = vsel %vm1813, %v1776, %v1845
        %v1878 = vsel %vm1814, %v1779, %v1846
        %v1879 = vsel %vm1815, %v1782, %v1847
        %s1880 = scalar_lea.vmem [#allocation2], 768
        %v1881 = vld [vmem:[%s1880] sm:$0xff]
        %v1882 = vld [vmem:[%s1880 + $0x8] sm:$0xff]
        %v1883 = vld [vmem:[%s1880 + $0x10] sm:$0xff]
        %v1884 = vld [vmem:[%s1880 + $0x18] sm:$0xff]
        %v1885 = vld [vmem:[%s1880 + $0x20] sm:$0xff]
        %v1886 = vld [vmem:[%s1880 + $0x28] sm:$0xff]
        %v1887 = vld [vmem:[%s1880 + $0x30] sm:$0xff]
        %v1888 = vld [vmem:[%s1880 + $0x38] sm:$0xff]
        %v1889 = vld [vmem:[%s1880 + $0x40] sm:$0xff]
        %v1890 = vld [vmem:[%s1880 + $0x48] sm:$0xff]
        %v1891 = vld [vmem:[%s1880 + $0x50] sm:$0xff]
        %v1892 = vld [vmem:[%s1880 + $0x58] sm:$0xff]
        %v1893 = vld [vmem:[%s1880 + $0x60] sm:$0xff]
        %v1894 = vld [vmem:[%s1880 + $0x68] sm:$0xff]
        %v1895 = vld [vmem:[%s1880 + $0x70] sm:$0xff]
        %v1896 = vld [vmem:[%s1880 + $0x78] sm:$0xff]
        %v1897 = vld [vmem:[%s2 + $0x6] sm:$0x1]
        %v1898 = vperm.slane %v1897, 0
        %1899 = vmatpush.msra.mxu0 %v1896
        %1900 = vmatpush.msra.mxu0 %v1895
        %1901 = vmatpush.msra.mxu0 %v1894
        %1902 = vmatpush.msra.mxu0 %v1893
        %1903 = vmatpush.msra.mxu0 %v1892
        %1904 = vmatpush.msra.mxu0 %v1891
        %1905 = vmatpush.msra.mxu0 %v1890
        %1906 = vmatpush.msra.mxu0 %v1889
        %1907 = vmatpush.msra.mxu0 %v1888
        %1908 = vmatpush.msra.mxu0 %v1887
        %1909 = vmatpush.msra.mxu0 %v1886
        %1910 = vmatpush.msra.mxu0 %v1885
        %1911 = vmatpush.msra.mxu0 %v1884
        %1912 = vmatpush.msra.mxu0 %v1883
        %1913 = vmatpush.msra.mxu0 %v1882
        %1914 = vmatpush.msra.mxu0 %v1881
        %1915 = vmatmul.f32.gmra.mxu0 %v1848
        %v1916 = vpop.f32.mrf.mxu0
        %v1917 = vadd.f32 %v1898, %v1916
        %1918 = vmatmul.f32.gmra.mxu0 %v1849
        %v1919 = vpop.f32.mrf.mxu0
        %v1920 = vadd.f32 %v1898, %v1919
        %1921 = vmatmul.f32.gmra.mxu0 %v1850
        %v1922 = vpop.f32.mrf.mxu0
        %v1923 = vadd.f32 %v1898, %v1922
        %1924 = vmatmul.f32.gmra.mxu0 %v1851
        %v1925 = vpop.f32.mrf.mxu0
        %v1926 = vadd.f32 %v1898, %v1925
        %1927 = vmatmul.f32.gmra.mxu0 %v1852
        %v1928 = vpop.f32.mrf.mxu0
        %v1929 = vadd.f32 %v1898, %v1928
        %1930 = vmatmul.f32.gmra.mxu0 %v1853
        %v1931 = vpop.f32.mrf.mxu0
        %v1932 = vadd.f32 %v1898, %v1931
        %1933 = vmatmul.f32.gmra.mxu0 %v1854
        %v1934 = vpop.f32.mrf.mxu0
        %v1935 = vadd.f32 %v1898, %v1934
        %1936 = vmatmul.f32.gmra.mxu0 %v1855
        %v1937 = vpop.f32.mrf.mxu0
        %v1938 = vadd.f32 %v1898, %v1937
        %1939 = vmatmul.f32.gmra.mxu0 %v1856
        %v1940 = vpop.f32.mrf.mxu0
        %v1941 = vadd.f32 %v1898, %v1940
        %1942 = vmatmul.f32.gmra.mxu0 %v1857
        %v1943 = vpop.f32.mrf.mxu0
        %v1944 = vadd.f32 %v1898, %v1943
        %1945 = vmatmul.f32.gmra.mxu0 %v1858
        %v1946 = vpop.f32.mrf.mxu0
        %v1947 = vadd.f32 %v1898, %v1946
        %1948 = vmatmul.f32.gmra.mxu0 %v1859
        %v1949 = vpop.f32.mrf.mxu0
        %v1950 = vadd.f32 %v1898, %v1949
        %1951 = vmatmul.f32.gmra.mxu0 %v1860
        %v1952 = vpop.f32.mrf.mxu0
        %v1953 = vadd.f32 %v1898, %v1952
        %1954 = vmatmul.f32.gmra.mxu0 %v1861
        %v1955 = vpop.f32.mrf.mxu0
        %v1956 = vadd.f32 %v1898, %v1955
        %1957 = vmatmul.f32.gmra.mxu0 %v1862
        %v1958 = vpop.f32.mrf.mxu0
        %v1959 = vadd.f32 %v1898, %v1958
        %1960 = vmatmul.f32.gmra.mxu0 %v1863
        %v1961 = vpop.f32.mrf.mxu0
        %v1962 = vadd.f32 %v1898, %v1961
        %1963 = vmatmul.f32.gmra.mxu0 %v1864
        %v1964 = vpop.f32.mrf.mxu0
        %v1965 = vadd.f32 %v1898, %v1964
        %1966 = vmatmul.f32.gmra.mxu0 %v1865
        %v1967 = vpop.f32.mrf.mxu0
        %v1968 = vadd.f32 %v1898, %v1967
        %1969 = vmatmul.f32.gmra.mxu0 %v1866
        %v1970 = vpop.f32.mrf.mxu0
        %v1971 = vadd.f32 %v1898, %v1970
        %1972 = vmatmul.f32.gmra.mxu0 %v1867
        %v1973 = vpop.f32.mrf.mxu0
        %v1974 = vadd.f32 %v1898, %v1973
        %1975 = vmatmul.f32.gmra.mxu0 %v1868
        %v1976 = vpop.f32.mrf.mxu0
        %v1977 = vadd.f32 %v1898, %v1976
        %1978 = vmatmul.f32.gmra.mxu0 %v1869
        %v1979 = vpop.f32.mrf.mxu0
        %v1980 = vadd.f32 %v1898, %v1979
        %1981 = vmatmul.f32.gmra.mxu0 %v1870
        %v1982 = vpop.f32.mrf.mxu0
        %v1983 = vadd.f32 %v1898, %v1982
        %1984 = vmatmul.f32.gmra.mxu0 %v1871
        %v1985 = vpop.f32.mrf.mxu0
        %v1986 = vadd.f32 %v1898, %v1985
        %1987 = vmatmul.f32.gmra.mxu0 %v1872
        %v1988 = vpop.f32.mrf.mxu0
        %v1989 = vadd.f32 %v1898, %v1988
        %1990 = vmatmul.f32.gmra.mxu0 %v1873
        %v1991 = vpop.f32.mrf.mxu0
        %v1992 = vadd.f32 %v1898, %v1991
        %1993 = vmatmul.f32.gmra.mxu0 %v1874
        %v1994 = vpop.f32.mrf.mxu0
        %v1995 = vadd.f32 %v1898, %v1994
        %1996 = vmatmul.f32.gmra.mxu0 %v1875
        %v1997 = vpop.f32.mrf.mxu0
        %v1998 = vadd.f32 %v1898, %v1997
        %1999 = vmatmul.f32.gmra.mxu0 %v1876
        %v2000 = vpop.f32.mrf.mxu0
        %v2001 = vadd.f32 %v1898, %v2000
        %2002 = vmatmul.f32.gmra.mxu0 %v1877
        %v2003 = vpop.f32.mrf.mxu0
        %v2004 = vadd.f32 %v1898, %v2003
        %2005 = vmatmul.f32.gmra.mxu0 %v1878
        %v2006 = vpop.f32.mrf.mxu0
        %v2007 = vadd.f32 %v1898, %v2006
        %2008 = vmatmul.f32.gmra.mxu0 %v1879
        %v2009 = vpop.f32.mrf.mxu0
        %v2010 = vadd.f32 %v1898, %v2009
        %2011 = vdwg.mxu0
        %2012 = vst [vmem:[%s189] sm:$0xff] %v1917
        %2013 = vst [vmem:[%s189 + $0x8] sm:$0xff] %v1920
        %2014 = vst [vmem:[%s189 + $0x10] sm:$0xff] %v1923
        %2015 = vst [vmem:[%s189 + $0x18] sm:$0xff] %v1926
        %2016 = vst [vmem:[%s189 + $0x20] sm:$0xff] %v1929
        %2017 = vst [vmem:[%s189 + $0x28] sm:$0xff] %v1932
        %2018 = vst [vmem:[%s189 + $0x30] sm:$0xff] %v1935
        %2019 = vst [vmem:[%s189 + $0x38] sm:$0xff] %v1938
        %2020 = vst [vmem:[%s189 + $0x40] sm:$0xff] %v1941
        %2021 = vst [vmem:[%s189 + $0x48] sm:$0xff] %v1944
        %2022 = vst [vmem:[%s189 + $0x50] sm:$0xff] %v1947
        %2023 = vst [vmem:[%s189 + $0x58] sm:$0xff] %v1950
        %2024 = vst [vmem:[%s189 + $0x60] sm:$0xff] %v1953
        %2025 = vst [vmem:[%s189 + $0x68] sm:$0xff] %v1956
        %2026 = vst [vmem:[%s189 + $0x70] sm:$0xff] %v1959
        %2027 = vst [vmem:[%s189 + $0x78] sm:$0xff] %v1962
        %2028 = vst [vmem:[%s189 + $0x80] sm:$0xff] %v1965
        %2029 = vst [vmem:[%s189 + $0x88] sm:$0xff] %v1968
        %2030 = vst [vmem:[%s189 + $0x90] sm:$0xff] %v1971
        %2031 = vst [vmem:[%s189 + $0x98] sm:$0xff] %v1974
        %2032 = vst [vmem:[%s189 + $0xa0] sm:$0xff] %v1977
        %2033 = vst [vmem:[%s189 + $0xa8] sm:$0xff] %v1980
        %2034 = vst [vmem:[%s189 + $0xb0] sm:$0xff] %v1983
        %2035 = vst [vmem:[%s189 + $0xb8] sm:$0xff] %v1986
        %2036 = vst [vmem:[%s189 + $0xc0] sm:$0xff] %v1989
        %2037 = vst [vmem:[%s189 + $0xc8] sm:$0xff] %v1992
        %2038 = vst [vmem:[%s189 + $0xd0] sm:$0xff] %v1995
        %2039 = vst [vmem:[%s189 + $0xd8] sm:$0xff] %v1998
        %2040 = vst [vmem:[%s189 + $0xe0] sm:$0xff] %v2001
        %2041 = vst [vmem:[%s189 + $0xe8] sm:$0xff] %v2004
        %2042 = vst [vmem:[%s189 + $0xf0] sm:$0xff] %v2007
        %2043 = vst [vmem:[%s189 + $0xf8] sm:$0xff] %v2010
        %s2044 = smul.u32 32, %s15
        %p2045 = scmp.lt.s32.totalorder %s2044, 63
        %s2046 = scalar_select %p2045, %s2044, 63
        %s2047 = smul.addr %s2046, 8
        %s2048 = scalar_lea.vmem %s3, %s2047
        // Predicated region
        $region37: #{mlp_forward.1} parent=31 // pred_check
          %p2049 = pneg %p101
        $region38: #{mlp_forward.1} parent=31 // pred_check_branch
          %2051 = sbr.rel (%p2049) target = $region40
        $region39: #{mlp_forward.1} parent=31 // pred_region
          %s2052 = smul.u32 32, %s15
        $region40: #{mlp_forward.1} parent=31 // pred_fallthru
          _
      $region32: #{mlp_forward.1} parent=5 // pred_fallthru
        _
      %p2053 = scmp.le.s32.totalorder 2, %s10
      // Predicated region
      $region41: #{mlp_forward.1} parent=5 // pred_check
        %p2054 = pneg %p2053
      $region42: #{mlp_forward.1} parent=5 // pred_check_branch
        %2056 = sbr.rel (%p2054) target = $region44
      $region43: #{mlp_forward.1} parent=5 // pred_region
        %s2057 = ssub.s32 %s10, 2
        // Predicated region
        $region45: #{mlp_forward.1} parent=43 // pred_check
          %p2058 = pneg %p107
        $region46: #{mlp_forward.1} parent=43 // pred_check_branch
          %2060 = sbr.rel (%p2058) target = $region48
        $region47: #{mlp_forward.1} parent=43 // pred_region
          %s2061 = smul.u32 32, %s16
          %p2062 = scmp.lt.s32.totalorder %s2061, 63
          %s2063 = scalar_select %p2062, %s2061, 63
          %s2064 = smul.addr %s2063, 8
          %s2065 = scalar_lea.vmem %s3, %s2064
        $region48: #{mlp_forward.1} parent=43 // pred_fallthru
          _
      $region44: #{mlp_forward.1} parent=5 // pred_fallthru
        _
    $region6: #{mlp_forward.1} parent=1 // loop_footer
      %s14 = sadd.s32 1, %s10
    $region7: #{mlp_forward.1} parent=1 // loop_footer_branch
      %9 = sbr.rel target = $region3
    $region8: #{mlp_forward.1} parent=1 // loop_exit
      _
    %2066 = vsyncpa [#allocation3], 1
    %s2067 = scalar_lea.sflag [#allocation3], 1
    %2068 = vsyncpa %s2067, 1

</llo_original>
